<compile_context>
chip_gen: v5e
topology: v5e:2x2
jax: 0.10.0
libtpu: 0.0.40
codegen_flags: <defaults>
</compile_context>

<pallas_src>
import jax
import jax.numpy as jnp
from jax.experimental import pallas as pl
from jax.experimental.pallas import tpu as pltpu

BN_EPS = 1e-5
LRELU_SLOPE = 0.2


# ------------------------------ tile helpers -------------------------------- #

def _largest_divisor_under(n, limit):
    best = 1
    for d in range(1, n + 1):
        if n % d == 0 and d <= limit:
            best = d
    return best


def _pick_blur_tile_rows(Ho, Wo, C, budget_bytes=6 << 20):
    per_row = 4 * (2 * Wo * 2 * C + Wo * C)          # in tile + out tile per out row
    limit = max(1, budget_bytes // max(per_row, 1))
    return _largest_divisor_under(Ho, limit)


def _pick_conv_tile_rows(H, W, Cin, Cout, budget_bytes=6 << 20):
    per_row = 4 * ((W + 2) * Cin * 2                 # halo tile (double-buffered)
                   + W * (9 * Cin + Cout)            # patches + accumulator
                   + W * Cout * 2)                   # output tile (double-buffered)
    limit = max(1, budget_bytes // max(per_row, 1))
    return _largest_divisor_under(H, limit)


# ----------------------------- Pallas kernels ------------------------------- #

def _blur_kernel(x_ref, o_ref):
    # x_ref: (1, tr, 2, Wo, 2*C)  -- (row-pair, col-pair folded into channels)
    # o_ref: (1, tr, Wo, C)
    C = o_ref.shape[-1]
    x = x_ref[...]
    s = x[0, :, 0, :, :] + x[0, :, 1, :, :]          # sum over the 2 rows -> (tr, Wo, 2C)
    o_ref[0] = 0.25 * (s[:, :, :C] + s[:, :, C:])    # sum over the 2 cols, scale


def _make_conv_pass1_kernel(tr, W, Cin, Cout):
    def kernel(main_ref, ha_ref, hb_ref, w_ref, b_ref, y_ref, st_ref):
        # main_ref: (1, tr, Wp, Cin)   rows [i*tr, i*tr+tr) of the padded input
        # ha_ref/hb_ref: (1, 1, Wp, Cin)  the 2 halo rows below the main tile
        # w_ref: (9*Cin, Cout)  concatenated 3x3 taps, K = 9*Cin
        # b_ref: (1, Cout)      conv bias
        # y_ref: (1, tr, W, Cout)      conv output tile
        # st_ref: (1, 2, Cout)         resident per-sample [sum; sum-of-squares]
        i = pl.program_id(1)

        tile = jnp.concatenate([main_ref[0], ha_ref[0], hb_ref[0]], axis=0)  # (tr+2, Wp, Cin)

        # in-kernel im2col: 9 shifted views -> one (tr*W, 9*Cin) operand.
        taps = [tile[dh:dh + tr, dw:dw + W, :].reshape(tr * W, Cin)
                for dh in range(3) for dw in range(3)]
        patches = jnp.concatenate(taps, axis=-1)                             # (tr*W, 9*Cin)

        acc = jnp.dot(patches, w_ref[...], preferred_element_type=jnp.float32)
        acc = acc + b_ref[...]                                               # (tr*W, Cout)
        y_ref[0] = acc.reshape(tr, W, Cout)

        ssum = jnp.sum(acc, axis=0, keepdims=True)                           # (1, Cout)
        ssq = jnp.sum(acc * acc, axis=0, keepdims=True)                      # (1, Cout)
        st = jnp.concatenate([ssum, ssq], axis=0)                            # (2, Cout)

        @pl.when(i == 0)
        def _():
            st_ref[0] = st

        @pl.when(i != 0)
        def _():
            st_ref[0] = st_ref[0] + st

    return kernel


def _bn_lrelu_kernel(y_ref, sc_ref, sh_ref, o_ref):
    # y_ref/o_ref: (1, tr, W, Cout); sc_ref/sh_ref: (1, Cout) fused scale/shift.
    z = y_ref[...] * sc_ref[...] + sh_ref[...]
    o_ref[...] = jnp.where(z > 0, z, LRELU_SLOPE * z)


# -------------------------------- wrappers ---------------------------------- #

def blur_pool_s2(x_nhwc):
    """kornia.blur_pool2d(x, 2) with stride 2 == 2x2 average pool, stride 2."""
    N, H, W, C = x_nhwc.shape
    Ho, Wo = H // 2, W // 2
    x_nhwc = x_nhwc[:, :2 * Ho, :2 * Wo, :]
    # Contiguous (free) reshape exposing the 2x2 pooling window:
    #   (N, 2Ho, 2Wo, C) -> (N, Ho, 2, Wo, 2*C); channel index = colpair*C + c.
    xr = x_nhwc.reshape(N, Ho, 2, Wo, 2 * C)

    tr = _pick_blur_tile_rows(Ho, Wo, C)
    grid = (N, Ho // tr)
    return pl.pallas_call(
        _blur_kernel,
        out_shape=jax.ShapeDtypeStruct((N, Ho, Wo, C), jnp.float32),
        grid=grid,
        in_specs=[pl.BlockSpec((1, tr, 2, Wo, 2 * C),
                               lambda n, i: (n, i, 0, 0, 0))],
        out_specs=pl.BlockSpec((1, tr, Wo, C), lambda n, i: (n, i, 0, 0)),
        compiler_params=pltpu.CompilerParams(
            dimension_semantics=("parallel", "parallel")),
    )(xr)


def _conv3x3_pass1(xp, w_cat, bias2d, tr):
    """Tiled Conv3x3 (pad already applied) + bias; also returns per-sample
    [sum, sum_of_squares] over (H, W) for the two-pass BatchNorm."""
    N, Hp, Wp, Cin = xp.shape
    H, W = Hp - 2, Wp - 2
    Cout = w_cat.shape[-1]
    nT = H // tr
    kernel = _make_conv_pass1_kernel(tr, W, Cin, Cout)

    y, stats = pl.pallas_call(
        kernel,
        out_shape=(jax.ShapeDtypeStruct((N, H, W, Cout), jnp.float32),
                   jax.ShapeDtypeStruct((N, 2, Cout), jnp.float32)),
        grid=(N, nT),
        in_specs=[
            # main rows of the padded input: [i*tr, i*tr + tr)
            pl.BlockSpec((1, tr, Wp, Cin), lambda n, i: (n, i, 0, 0)),
            # two single-row halo views of the SAME padded array (rows +tr, +tr+1)
            pl.BlockSpec((1, 1, Wp, Cin), lambda n, i: (n, (i + 1) * tr, 0, 0)),
            pl.BlockSpec((1, 1, Wp, Cin), lambda n, i: (n, (i + 1) * tr + 1, 0, 0)),
            # weights / bias: same block every step -> DMA'd once, stays in VMEM
            pl.BlockSpec((9 * Cin, Cout), lambda n, i: (0, 0)),
            pl.BlockSpec((1, Cout), lambda n, i: (0, 0)),
        ],
        out_specs=(
            pl.BlockSpec((1, tr, W, Cout), lambda n, i: (n, i, 0, 0)),
            # per-sample stats accumulator: resident across the row-tile axis
            pl.BlockSpec((1, 2, Cout), lambda n, i: (n, 0, 0)),
        ),
        compiler_params=pltpu.CompilerParams(
            dimension_semantics=("parallel", "arbitrary")),
    )(xp, xp, xp, w_cat, bias2d)
    return y, stats


def _bn_lrelu_apply(y, scale, shift, tr):
    N, H, W, Cout = y.shape
    return pl.pallas_call(
        _bn_lrelu_kernel,
        out_shape=jax.ShapeDtypeStruct((N, H, W, Cout), jnp.float32),
        grid=(N, H // tr),
        in_specs=[
            pl.BlockSpec((1, tr, W, Cout), lambda n, i: (n, i, 0, 0)),
            pl.BlockSpec((1, Cout), lambda n, i: (0, 0)),
            pl.BlockSpec((1, Cout), lambda n, i: (0, 0)),
        ],
        out_specs=pl.BlockSpec((1, tr, W, Cout), lambda n, i: (n, i, 0, 0)),
        compiler_params=pltpu.CompilerParams(
            dimension_semantics=("parallel", "parallel")),
    )(y, scale.reshape(1, Cout), shift.reshape(1, Cout))


def conv3x3_bn_lrelu(x_nhwc, w9, b, gamma, beta):
    """Conv3x3(pad=1) + training-mode BatchNorm2d + LeakyReLU(0.2), two passes."""
    N, H, W, Cin = x_nhwc.shape
    Cout = w9.shape[-1]
    w_cat = w9.reshape(9 * Cin, Cout)                          # tap-major K layout
    xp = jnp.pad(x_nhwc, ((0, 0), (1, 1), (1, 1), (0, 0)))     # zero pad (glue)
    tr = _pick_conv_tile_rows(H, W, Cin, Cout)

    y, stats = _conv3x3_pass1(xp, w_cat, b.reshape(1, Cout), tr)

    # Tiny reduction of the per-sample partial sums -> global batch statistics.
    cnt = N * H * W
    mean = stats[:, 0, :].sum(axis=0) / cnt
    ex2 = stats[:, 1, :].sum(axis=0) / cnt
    var = jnp.maximum(ex2 - mean * mean, 0.0)                  # biased variance
    inv = jax.lax.rsqrt(var + BN_EPS)
    scale = gamma * inv
    shift = beta - mean * scale

    return _bn_lrelu_apply(y, scale, shift, tr)


def down_lpf_forward(x_nchw, params):
    """Down_lpf.forward: BlurPool(stride=2) -> DoubleConv(in, out, None)."""
    x = jnp.transpose(x_nchw, (0, 2, 3, 1)).astype(jnp.float32)   # NCHW -> NHWC (glue)
    x = blur_pool_s2(x)
    x = conv3x3_bn_lrelu(x, params["w1"], params["b1"], params["g1"], params["be1"])
    x = conv3x3_bn_lrelu(x, params["w2"], params["b2"], params["g2"], params["be2"])
    return jnp.transpose(x, (0, 3, 1, 2))                         # NHWC -> NCHW (glue)


# --------------------------- parameter creation ------------------------------ #

def init_params(key, in_channels, out_channels):
    mid = out_channels  # DoubleConv(in, out, None) -> mid_channels = out_channels
    ks = jax.random.split(key, 8)
    return {
        # weights stored as (9, Cin, Cout), tap index = kh*3 + kw
        "w1": 0.2 * jax.random.normal(ks[0], (9, in_channels, mid), jnp.float32),
        "b1": 0.1 * jax.random.normal(ks[1], (mid,), jnp.float32),
        "g1": 1.0 + 0.1 * jax.random.normal(ks[2], (mid,), jnp.float32),
        "be1": 0.1 * jax.random.normal(ks[3], (mid,), jnp.float32),
        "w2": 0.2 * jax.random.normal(ks[4], (9, mid, out_channels), jnp.float32),
        "b2": 0.1 * jax.random.normal(ks[5], (out_channels,), jnp.float32),
        "g2": 1.0 + 0.1 * jax.random.normal(ks[6], (out_channels,), jnp.float32),
        "be2": 0.1 * jax.random.normal(ks[7], (out_channels,), jnp.float32),
    }


# ------------------------------ JAX reference -------------------------------- #

def _ref_forward(x_nchw, params):
    x = jnp.transpose(x_nchw, (0, 2, 3, 1)).astype(jnp.float32)
    N, H, W, C = x.shape
    x = x.reshape(N, H // 2, 2, W // 2, 2, C).mean(axis=(2, 4))   # blur_pool2d(x, 2)

    def conv_bn_lrelu(x, w9, b, g, be):
        cin, cout = w9.shape[1], w9.shape[2]
        w_hwio = w9.reshape(3, 3, cin, cout)
        y = jax.lax.conv_general_dilated(
            x, w_hwio, window_strides=(1, 1), padding="SAME",
            dimension_numbers=("NHWC", "HWIO", "NHWC")) + b
        mean = y.mean(axis=(0, 1, 2), keepdims=True)
        var = ((y - mean) ** 2).mean(axis=(0, 1, 2), keepdims=True)
        y = (y - mean) / jnp.sqrt(var + BN_EPS) * g + be
        return jnp.where(y > 0, y, LRELU_SLOPE * y)

    x = conv_bn_lrelu(x, params["w1"], params["b1"], params["g1"], params["be1"])
    x = conv_bn_lrelu(x, params["w2"], params["b2"], params["g2"], params["be2"])
    return jnp.transpose(x, (0, 3, 1, 2))


# ----------------------------------- main ------------------------------------ #

if __name__ == "__main__":
    key = jax.random.PRNGKey(0)
    k_x, k_p = jax.random.split(key)

    N, Cin, H, W = 2, 4, 16, 16
    Cout = 8
    x = jax.random.normal(k_x, (N, Cin, H, W), jnp.float32)
    params = init_params(k_p, Cin, Cout)

    fwd = jax.jit(down_lpf_forward)
    out = jax.block_until_ready(fwd(x, params))
    assert out.shape == (N, Cout, H // 2, W // 2), out.shape

    ref = jax.block_until_ready(_ref_forward(x, params))
    assert bool(jnp.all(jnp.isfinite(out)))
    err = float(jnp.max(jnp.abs(out - ref)))
    assert bool(jnp.allclose(out, ref, atol=1e-3, rtol=1e-3)), err

    print("KERNEL_OK")
</pallas_src>

<mosaic_0001>
module attributes {stable_mosaic.version = 11 : i64} {
  func.func @_blur_kernel(%arg0: i32, %arg1: i32, %arg2: memref<1x8x2x8x8xf32, #tpu.memory_space<vmem>>, %arg3: memref<1x8x8x4xf32, #tpu.memory_space<vmem>>) attributes {dimension_semantics = [#tpu.dimension_semantics<parallel>, #tpu.dimension_semantics<parallel>], iteration_bounds = array<i64: 2, 1>, scalar_prefetch = 0 : i64, scratch_operands = 0 : i64, tpu.core_type = #tpu.core_type<tc>, window_params = [{transform_indices = @transform_0, window_bounds = array<i64: 1, 8, 2, 8, 8>}, {transform_indices = @transform_1, window_bounds = array<i64: 1, 8, 8, 4>}]} {
    %c0 = arith.constant 0 : index
    %c0_0 = arith.constant 0 : index
    %c0_1 = arith.constant 0 : index
    %c0_2 = arith.constant 0 : index
    %c0_3 = arith.constant 0 : index
    %0 = vector.load %arg2[%c0, %c0_0, %c0_1, %c0_2, %c0_3] : memref<1x8x2x8x8xf32, #tpu.memory_space<vmem>>, vector<1x8x2x8x8xf32>
    %1 = vector.extract_strided_slice %0 {offsets = [0, 0, 0, 0, 0], sizes = [1, 8, 1, 8, 8], strides = [1, 1, 1, 1, 1]} : vector<1x8x2x8x8xf32> to vector<1x8x1x8x8xf32>
    %2 = vector.shape_cast %1 : vector<1x8x1x8x8xf32> to vector<8x8x8xf32>
    %3 = vector.extract_strided_slice %0 {offsets = [0, 0, 1, 0, 0], sizes = [1, 8, 1, 8, 8], strides = [1, 1, 1, 1, 1]} : vector<1x8x2x8x8xf32> to vector<1x8x1x8x8xf32>
    %4 = vector.shape_cast %3 : vector<1x8x1x8x8xf32> to vector<8x8x8xf32>
    %5 = arith.addf %2, %4 : vector<8x8x8xf32>
    %6 = vector.extract_strided_slice %5 {offsets = [0, 0, 0], sizes = [8, 8, 4], strides = [1, 1, 1]} : vector<8x8x8xf32> to vector<8x8x4xf32>
    %7 = vector.extract_strided_slice %5 {offsets = [0, 0, 4], sizes = [8, 8, 4], strides = [1, 1, 1]} : vector<8x8x8xf32> to vector<8x8x4xf32>
    %8 = arith.addf %6, %7 : vector<8x8x4xf32>
    %cst = arith.constant 2.500000e-01 : f32
    %9 = vector.broadcast %cst : f32 to vector<8x8x4xf32>
    %10 = arith.mulf %9, %8 : vector<8x8x4xf32>
    %c0_4 = arith.constant 0 : index
    %c0_5 = arith.constant 0 : index
    %c0_6 = arith.constant 0 : index
    %c0_7 = arith.constant 0 : index
    %11 = vector.load %arg3[%c0_4, %c0_5, %c0_6, %c0_7] : memref<1x8x8x4xf32, #tpu.memory_space<vmem>>, vector<1x8x8x4xf32>
    %12 = vector.shape_cast %11 : vector<1x8x8x4xf32> to vector<8x8x4xf32>
    %13 = vector.shape_cast %10 : vector<8x8x4xf32> to vector<1x8x8x4xf32>
    tpu.vector_store %arg3[%c0_4, %c0_5, %c0_6, %c0_7], %13 {strides = array<i32>} : memref<1x8x8x4xf32, #tpu.memory_space<vmem>>, vector<1x8x8x4xf32>,
    return
  }
  func.func @transform_0(%arg0: i32, %arg1: i32) -> (i32, i32, i32, i32, i32) {
    %c0_i32 = arith.constant 0 : i32
    %c0_i32_0 = arith.constant 0 : i32
    %c0_i32_1 = arith.constant 0 : i32
    %c0_i32_2 = arith.constant 0 : i32
    return %arg0, %arg1, %c0_i32, %c0_i32_0, %c0_i32_1 : i32, i32, i32, i32, i32
  }
  func.func @transform_1(%arg0: i32, %arg1: i32) -> (i32, i32, i32, i32) {
    %c0_i32 = arith.constant 0 : i32
    %c0_i32_0 = arith.constant 0 : i32
    %c0_i32_1 = arith.constant 0 : i32
    return %arg0, %arg1, %c0_i32, %c0_i32_0 : i32, i32, i32, i32
  }
}

module attributes {stable_mosaic.version = 11 : i64} {
  func.func @kernel(%arg0: i32, %arg1: i32, %arg2: memref<1x8x10x4xf32, #tpu.memory_space<vmem>>, %arg3: memref<1x1x10x4xf32, #tpu.memory_space<vmem>>, %arg4: memref<1x1x10x4xf32, #tpu.memory_space<vmem>>, %arg5: memref<36x8xf32, #tpu.memory_space<vmem>>, %arg6: memref<1x8xf32, #tpu.memory_space<vmem>>, %arg7: memref<1x8x8x8xf32, #tpu.memory_space<vmem>>, %arg8: memref<1x2x8xf32, #tpu.memory_space<vmem>>) attributes {dimension_semantics = [#tpu.dimension_semantics<parallel>, #tpu.dimension_semantics<arbitrary>], iteration_bounds = array<i64: 2, 1>, scalar_prefetch = 0 : i64, scratch_operands = 0 : i64, tpu.core_type = #tpu.core_type<tc>, window_params = [{transform_indices = @transform_0, window_bounds = array<i64: 1, 8, 10, 4>}, {transform_indices = @transform_1, window_bounds = array<i64: 1, 1, 10, 4>}, {transform_indices = @transform_2, window_bounds = array<i64: 1, 1, 10, 4>}, {pipeline_mode = #tpu.pipeline_mode<synchronous>, transform_indices = @transform_3, window_bounds = array<i64: 36, 8>}, {pipeline_mode = #tpu.pipeline_mode<synchronous>, transform_indices = @transform_4, window_bounds = array<i64: 1, 8>}, {transform_indices = @transform_5, window_bounds = array<i64: 1, 8, 8, 8>}, {transform_indices = @transform_6, window_bounds = array<i64: 1, 2, 8>}]} {
    %c0 = arith.constant 0 : index
    %c0_0 = arith.constant 0 : index
    %c0_1 = arith.constant 0 : index
    %c0_2 = arith.constant 0 : index
    %0 = vector.load %arg2[%c0, %c0_0, %c0_1, %c0_2] : memref<1x8x10x4xf32, #tpu.memory_space<vmem>>, vector<1x8x10x4xf32>
    %1 = vector.shape_cast %0 : vector<1x8x10x4xf32> to vector<8x10x4xf32>
    %c0_3 = arith.constant 0 : index
    %c0_4 = arith.constant 0 : index
    %c0_5 = arith.constant 0 : index
    %c0_6 = arith.constant 0 : index
    %2 = vector.load %arg3[%c0_3, %c0_4, %c0_5, %c0_6] : memref<1x1x10x4xf32, #tpu.memory_space<vmem>>, vector<1x1x10x4xf32>
    %3 = vector.shape_cast %2 : vector<1x1x10x4xf32> to vector<1x10x4xf32>
    %c0_7 = arith.constant 0 : index
    %c0_8 = arith.constant 0 : index
    %c0_9 = arith.constant 0 : index
    %c0_10 = arith.constant 0 : index
    %4 = vector.load %arg4[%c0_7, %c0_8, %c0_9, %c0_10] : memref<1x1x10x4xf32, #tpu.memory_space<vmem>>, vector<1x1x10x4xf32>
    %5 = vector.shape_cast %4 : vector<1x1x10x4xf32> to vector<1x10x4xf32>
    %6 = tpu.concatenate %1, %3, %5 in 0 : vector<8x10x4xf32>, vector<1x10x4xf32>, vector<1x10x4xf32> -> vector<10x10x4xf32>
    %7 = vector.extract_strided_slice %6 {offsets = [0, 0, 0], sizes = [8, 8, 4], strides = [1, 1, 1]} : vector<10x10x4xf32> to vector<8x8x4xf32>
    %8 = vector.shape_cast %7 : vector<8x8x4xf32> to vector<64x4xf32>
    %9 = vector.extract_strided_slice %6 {offsets = [0, 1, 0], sizes = [8, 8, 4], strides = [1, 1, 1]} : vector<10x10x4xf32> to vector<8x8x4xf32>
    %10 = vector.shape_cast %9 : vector<8x8x4xf32> to vector<64x4xf32>
    %11 = vector.extract_strided_slice %6 {offsets = [0, 2, 0], sizes = [8, 8, 4], strides = [1, 1, 1]} : vector<10x10x4xf32> to vector<8x8x4xf32>
    %12 = vector.shape_cast %11 : vector<8x8x4xf32> to vector<64x4xf32>
    %13 = vector.extract_strided_slice %6 {offsets = [1, 0, 0], sizes = [8, 8, 4], strides = [1, 1, 1]} : vector<10x10x4xf32> to vector<8x8x4xf32>
    %14 = vector.shape_cast %13 : vector<8x8x4xf32> to vector<64x4xf32>
    %15 = vector.extract_strided_slice %6 {offsets = [1, 1, 0], sizes = [8, 8, 4], strides = [1, 1, 1]} : vector<10x10x4xf32> to vector<8x8x4xf32>
    %16 = vector.shape_cast %15 : vector<8x8x4xf32> to vector<64x4xf32>
    %17 = vector.extract_strided_slice %6 {offsets = [1, 2, 0], sizes = [8, 8, 4], strides = [1, 1, 1]} : vector<10x10x4xf32> to vector<8x8x4xf32>
    %18 = vector.shape_cast %17 : vector<8x8x4xf32> to vector<64x4xf32>
    %19 = vector.extract_strided_slice %6 {offsets = [2, 0, 0], sizes = [8, 8, 4], strides = [1, 1, 1]} : vector<10x10x4xf32> to vector<8x8x4xf32>
    %20 = vector.shape_cast %19 : vector<8x8x4xf32> to vector<64x4xf32>
    %21 = vector.extract_strided_slice %6 {offsets = [2, 1, 0], sizes = [8, 8, 4], strides = [1, 1, 1]} : vector<10x10x4xf32> to vector<8x8x4xf32>
    %22 = vector.shape_cast %21 : vector<8x8x4xf32> to vector<64x4xf32>
    %23 = vector.extract_strided_slice %6 {offsets = [2, 2, 0], sizes = [8, 8, 4], strides = [1, 1, 1]} : vector<10x10x4xf32> to vector<8x8x4xf32>
    %24 = vector.shape_cast %23 : vector<8x8x4xf32> to vector<64x4xf32>
    %25 = tpu.concatenate %8, %10, %12, %14, %16, %18, %20, %22, %24 in 1 : vector<64x4xf32>, vector<64x4xf32>, vector<64x4xf32>, vector<64x4xf32>, vector<64x4xf32>, vector<64x4xf32>, vector<64x4xf32>, vector<64x4xf32>, vector<64x4xf32> -> vector<64x36xf32>
    %c0_11 = arith.constant 0 : index
    %c0_12 = arith.constant 0 : index
    %26 = vector.load %arg5[%c0_11, %c0_12] : memref<36x8xf32, #tpu.memory_space<vmem>>, vector<36x8xf32>
    %cst = arith.constant dense<0.000000e+00> : vector<64x8xf32>
    %27 = tpu.matmul %25, %26, %cst {dimension_numbers = #tpu.dot_dimension_numbers<[1], [0], [0], [1], [0, 0, 1, 1], [], []>} : vector<64x36xf32>, vector<36x8xf32>, vector<64x8xf32> -> vector<64x8xf32>
    %c0_13 = arith.constant 0 : index
    %c0_14 = arith.constant 0 : index
    %28 = vector.load %arg6[%c0_13, %c0_14] : memref<1x8xf32, #tpu.memory_space<vmem>>, vector<1x8xf32>
    %29 = vector.broadcast %28 : vector<1x8xf32> to vector<64x8xf32>
    %30 = arith.addf %27, %29 : vector<64x8xf32>
    %31 = vector.shape_cast %30 : vector<64x8xf32> to vector<8x8x8xf32>
    %c0_15 = arith.constant 0 : index
    %c0_16 = arith.constant 0 : index
    %c0_17 = arith.constant 0 : index
    %c0_18 = arith.constant 0 : index
    %32 = vector.load %arg7[%c0_15, %c0_16, %c0_17, %c0_18] : memref<1x8x8x8xf32, #tpu.memory_space<vmem>>, vector<1x8x8x8xf32>
    %33 = vector.shape_cast %32 : vector<1x8x8x8xf32> to vector<8x8x8xf32>
    %34 = vector.shape_cast %31 : vector<8x8x8xf32> to vector<1x8x8x8xf32>
    tpu.vector_store %arg7[%c0_15, %c0_16, %c0_17, %c0_18], %34 {strides = array<i32>} : memref<1x8x8x8xf32, #tpu.memory_space<vmem>>, vector<1x8x8x8xf32>,
    %cst_19 = arith.constant dense<0.000000e+00> : vector<8xf32>
    %35 = vector.multi_reduction <add>, %30, %cst_19 [0] : vector<64x8xf32> to vector<8xf32>
    %36 = vector.shape_cast %35 : vector<8xf32> to vector<1x8xf32>
    %37 = arith.mulf %30, %30 : vector<64x8xf32>
    %cst_20 = arith.constant dense<0.000000e+00> : vector<8xf32>
    %38 = vector.multi_reduction <add>, %37, %cst_20 [0] : vector<64x8xf32> to vector<8xf32>
    %39 = vector.shape_cast %38 : vector<8xf32> to vector<1x8xf32>
    %40 = tpu.concatenate %36, %39 in 0 : vector<1x8xf32>, vector<1x8xf32> -> vector<2x8xf32>
    %c0_i32 = arith.constant 0 : i32
    %41 = arith.cmpi eq, %arg1, %c0_i32 : i32
    %42 = arith.extui %41 : i1 to i32
    %c0_i32_21 = arith.constant 0 : i32
    %43 = arith.cmpi ne, %42, %c0_i32_21 : i32
    scf.if %43 {
      %c0_24 = arith.constant 0 : index
      %c0_25 = arith.constant 0 : index
      %c0_26 = arith.constant 0 : index
      %47 = vector.load %arg8[%c0_24, %c0_25, %c0_26] : memref<1x2x8xf32, #tpu.memory_space<vmem>>, vector<1x2x8xf32>
      %48 = vector.shape_cast %47 : vector<1x2x8xf32> to vector<2x8xf32>
      %49 = vector.shape_cast %40 : vector<2x8xf32> to vector<1x2x8xf32>
      tpu.vector_store %arg8[%c0_24, %c0_25, %c0_26], %49 {strides = array<i32>} : memref<1x2x8xf32, #tpu.memory_space<vmem>>, vector<1x2x8xf32>,
    } else {
    }
    %c0_i32_22 = arith.constant 0 : i32
    %44 = arith.cmpi ne, %arg1, %c0_i32_22 : i32
    %45 = arith.extui %44 : i1 to i32
    %c0_i32_23 = arith.constant 0 : i32
    %46 = arith.cmpi ne, %45, %c0_i32_23 : i32
    scf.if %46 {
      %c0_24 = arith.constant 0 : index
      %c0_25 = arith.constant 0 : index
      %c0_26 = arith.constant 0 : index
      %47 = vector.load %arg8[%c0_24, %c0_25, %c0_26] : memref<1x2x8xf32, #tpu.memory_space<vmem>>, vector<1x2x8xf32>
      %48 = vector.shape_cast %47 : vector<1x2x8xf32> to vector<2x8xf32>
      %49 = arith.addf %48, %40 : vector<2x8xf32>
      %c0_27 = arith.constant 0 : index
      %c0_28 = arith.constant 0 : index
      %c0_29 = arith.constant 0 : index
      %50 = vector.load %arg8[%c0_27, %c0_28, %c0_29] : memref<1x2x8xf32, #tpu.memory_space<vmem>>, vector<1x2x8xf32>
      %51 = vector.shape_cast %50 : vector<1x2x8xf32> to vector<2x8xf32>
      %52 = vector.shape_cast %49 : vector<2x8xf32> to vector<1x2x8xf32>
      tpu.vector_store %arg8[%c0_27, %c0_28, %c0_29], %52 {strides = array<i32>} : memref<1x2x8xf32, #tpu.memory_space<vmem>>, vector<1x2x8xf32>,
    } else {
    }
    return
  }
  func.func @transform_0(%arg0: i32, %arg1: i32) -> (i32, i32, i32, i32) {
    %c0_i32 = arith.constant 0 : i32
    %c0_i32_0 = arith.constant 0 : i32
    %c0_i32_1 = arith.constant 0 : i32
    return %arg0, %arg1, %c0_i32, %c0_i32_0 : i32, i32, i32, i32
  }
  func.func @transform_1(%arg0: i32, %arg1: i32) -> (i32, i32, i32, i32) {
    %c1_i32 = arith.constant 1 : i32
    %0 = arith.addi %arg1, %c1_i32 : i32
    %c8_i32 = arith.constant 8 : i32
    %1 = arith.muli %0, %c8_i32 : i32
    %c0_i32 = arith.constant 0 : i32
    %c0_i32_0 = arith.constant 0 : i32
    %c0_i32_1 = arith.constant 0 : i32
    return %arg0, %1, %c0_i32, %c0_i32_0 : i32, i32, i32, i32
  }
  func.func @transform_2(%arg0: i32, %arg1: i32) -> (i32, i32, i32, i32) {
    %c1_i32 = arith.constant 1 : i32
    %0 = arith.addi %arg1, %c1_i32 : i32
    %c8_i32 = arith.constant 8 : i32
    %1 = arith.muli %0, %c8_i32 : i32
    %c1_i32_0 = arith.constant 1 : i32
    %2 = arith.addi %1, %c1_i32_0 : i32
    %c0_i32 = arith.constant 0 : i32
    %c0_i32_1 = arith.constant 0 : i32
    %c0_i32_2 = arith.constant 0 : i32
    return %arg0, %2, %c0_i32, %c0_i32_1 : i32, i32, i32, i32
  }
  func.func @transform_3(%arg0: i32, %arg1: i32) -> (i32, i32) {
    %c0_i32 = arith.constant 0 : i32
    %c0_i32_0 = arith.constant 0 : i32
    %c0_i32_1 = arith.constant 0 : i32
    return %c0_i32, %c0_i32_0 : i32, i32
  }
  func.func @transform_4(%arg0: i32, %arg1: i32) -> (i32, i32) {
    %c0_i32 = arith.constant 0 : i32
    %c0_i32_0 = arith.constant 0 : i32
    %c0_i32_1 = arith.constant 0 : i32
    return %c0_i32, %c0_i32_0 : i32, i32
  }
  func.func @transform_5(%arg0: i32, %arg1: i32) -> (i32, i32, i32, i32) {
    %c0_i32 = arith.constant 0 : i32
    %c0_i32_0 = arith.constant 0 : i32
    %c0_i32_1 = arith.constant 0 : i32
    return %arg0, %arg1, %c0_i32, %c0_i32_0 : i32, i32, i32, i32
  }
  func.func @transform_6(%arg0: i32, %arg1: i32) -> (i32, i32, i32) {
    %c0_i32 = arith.constant 0 : i32
    %c0_i32_0 = arith.constant 0 : i32
    %c0_i32_1 = arith.constant 0 : i32
    return %arg0, %c0_i32, %c0_i32_0 : i32, i32, i32
  }
}

module attributes {stable_mosaic.version = 11 : i64} {
  func.func @_bn_lrelu_kernel(%arg0: i32, %arg1: i32, %arg2: memref<1x8x8x8xf32, #tpu.memory_space<vmem>>, %arg3: memref<1x8xf32, #tpu.memory_space<vmem>>, %arg4: memref<1x8xf32, #tpu.memory_space<vmem>>, %arg5: memref<1x8x8x8xf32, #tpu.memory_space<vmem>>) attributes {dimension_semantics = [#tpu.dimension_semantics<parallel>, #tpu.dimension_semantics<parallel>], iteration_bounds = array<i64: 2, 1>, scalar_prefetch = 0 : i64, scratch_operands = 0 : i64, tpu.core_type = #tpu.core_type<tc>, window_params = [{transform_indices = @transform_0, window_bounds = array<i64: 1, 8, 8, 8>}, {pipeline_mode = #tpu.pipeline_mode<synchronous>, transform_indices = @transform_1, window_bounds = array<i64: 1, 8>}, {pipeline_mode = #tpu.pipeline_mode<synchronous>, transform_indices = @transform_2, window_bounds = array<i64: 1, 8>}, {transform_indices = @transform_3, window_bounds = array<i64: 1, 8, 8, 8>}]} {
    %c0 = arith.constant 0 : index
    %c0_0 = arith.constant 0 : index
    %c0_1 = arith.constant 0 : index
    %c0_2 = arith.constant 0 : index
    %0 = vector.load %arg2[%c0, %c0_0, %c0_1, %c0_2] : memref<1x8x8x8xf32, #tpu.memory_space<vmem>>, vector<1x8x8x8xf32>
    %c0_3 = arith.constant 0 : index
    %c0_4 = arith.constant 0 : index
    %1 = vector.load %arg3[%c0_3, %c0_4] : memref<1x8xf32, #tpu.memory_space<vmem>>, vector<1x8xf32>
    %2 = vector.shape_cast %1 : vector<1x8xf32> to vector<1x1x1x8xf32>
    %3 = vector.broadcast %2 : vector<1x1x1x8xf32> to vector<1x8x8x8xf32>
    %4 = arith.mulf %0, %3 : vector<1x8x8x8xf32>
    %c0_5 = arith.constant 0 : index
    %c0_6 = arith.constant 0 : index
    %5 = vector.load %arg4[%c0_5, %c0_6] : memref<1x8xf32, #tpu.memory_space<vmem>>, vector<1x8xf32>
    %6 = vector.shape_cast %5 : vector<1x8xf32> to vector<1x1x1x8xf32>
    %7 = vector.broadcast %6 : vector<1x1x1x8xf32> to vector<1x8x8x8xf32>
    %8 = arith.addf %4, %7 : vector<1x8x8x8xf32>
    %cst = arith.constant 0.000000e+00 : f32
    %9 = vector.broadcast %cst : f32 to vector<1x8x8x8xf32>
    %10 = arith.cmpf ogt, %8, %9 : vector<1x8x8x8xf32>
    %cst_7 = arith.constant 2.000000e-01 : f32
    %11 = vector.broadcast %cst_7 : f32 to vector<1x8x8x8xf32>
    %12 = arith.mulf %11, %8 : vector<1x8x8x8xf32>
    %13 = arith.select %10, %8, %12 : vector<1x8x8x8xi1>, vector<1x8x8x8xf32>
    %c0_8 = arith.constant 0 : index
    %c0_9 = arith.constant 0 : index
    %c0_10 = arith.constant 0 : index
    %c0_11 = arith.constant 0 : index
    %14 = vector.load %arg5[%c0_8, %c0_9, %c0_10, %c0_11] : memref<1x8x8x8xf32, #tpu.memory_space<vmem>>, vector<1x8x8x8xf32>
    tpu.vector_store %arg5[%c0_8, %c0_9, %c0_10, %c0_11], %13 {strides = array<i32>} : memref<1x8x8x8xf32, #tpu.memory_space<vmem>>, vector<1x8x8x8xf32>,
    return
  }
  func.func @transform_0(%arg0: i32, %arg1: i32) -> (i32, i32, i32, i32) {
    %c0_i32 = arith.constant 0 : i32
    %c0_i32_0 = arith.constant 0 : i32
    %c0_i32_1 = arith.constant 0 : i32
    return %arg0, %arg1, %c0_i32, %c0_i32_0 : i32, i32, i32, i32
  }
  func.func @transform_1(%arg0: i32, %arg1: i32) -> (i32, i32) {
    %c0_i32 = arith.constant 0 : i32
    %c0_i32_0 = arith.constant 0 : i32
    %c0_i32_1 = arith.constant 0 : i32
    return %c0_i32, %c0_i32_0 : i32, i32
  }
  func.func @transform_2(%arg0: i32, %arg1: i32) -> (i32, i32) {
    %c0_i32 = arith.constant 0 : i32
    %c0_i32_0 = arith.constant 0 : i32
    %c0_i32_1 = arith.constant 0 : i32
    return %c0_i32, %c0_i32_0 : i32, i32
  }
  func.func @transform_3(%arg0: i32, %arg1: i32) -> (i32, i32, i32, i32) {
    %c0_i32 = arith.constant 0 : i32
    %c0_i32_0 = arith.constant 0 : i32
    %c0_i32_1 = arith.constant 0 : i32
    return %arg0, %arg1, %c0_i32, %c0_i32_0 : i32, i32, i32, i32
  }
}

module attributes {stable_mosaic.version = 11 : i64} {
  func.func @kernel(%arg0: i32, %arg1: i32, %arg2: memref<1x8x10x8xf32, #tpu.memory_space<vmem>>, %arg3: memref<1x1x10x8xf32, #tpu.memory_space<vmem>>, %arg4: memref<1x1x10x8xf32, #tpu.memory_space<vmem>>, %arg5: memref<72x8xf32, #tpu.memory_space<vmem>>, %arg6: memref<1x8xf32, #tpu.memory_space<vmem>>, %arg7: memref<1x8x8x8xf32, #tpu.memory_space<vmem>>, %arg8: memref<1x2x8xf32, #tpu.memory_space<vmem>>) attributes {dimension_semantics = [#tpu.dimension_semantics<parallel>, #tpu.dimension_semantics<arbitrary>], iteration_bounds = array<i64: 2, 1>, scalar_prefetch = 0 : i64, scratch_operands = 0 : i64, tpu.core_type = #tpu.core_type<tc>, window_params = [{transform_indices = @transform_0, window_bounds = array<i64: 1, 8, 10, 8>}, {transform_indices = @transform_1, window_bounds = array<i64: 1, 1, 10, 8>}, {transform_indices = @transform_2, window_bounds = array<i64: 1, 1, 10, 8>}, {pipeline_mode = #tpu.pipeline_mode<synchronous>, transform_indices = @transform_3, window_bounds = array<i64: 72, 8>}, {pipeline_mode = #tpu.pipeline_mode<synchronous>, transform_indices = @transform_4, window_bounds = array<i64: 1, 8>}, {transform_indices = @transform_5, window_bounds = array<i64: 1, 8, 8, 8>}, {transform_indices = @transform_6, window_bounds = array<i64: 1, 2, 8>}]} {
    %c0 = arith.constant 0 : index
    %c0_0 = arith.constant 0 : index
    %c0_1 = arith.constant 0 : index
    %c0_2 = arith.constant 0 : index
    %0 = vector.load %arg2[%c0, %c0_0, %c0_1, %c0_2] : memref<1x8x10x8xf32, #tpu.memory_space<vmem>>, vector<1x8x10x8xf32>
    %1 = vector.shape_cast %0 : vector<1x8x10x8xf32> to vector<8x10x8xf32>
    %c0_3 = arith.constant 0 : index
    %c0_4 = arith.constant 0 : index
    %c0_5 = arith.constant 0 : index
    %c0_6 = arith.constant 0 : index
    %2 = vector.load %arg3[%c0_3, %c0_4, %c0_5, %c0_6] : memref<1x1x10x8xf32, #tpu.memory_space<vmem>>, vector<1x1x10x8xf32>
    %3 = vector.shape_cast %2 : vector<1x1x10x8xf32> to vector<1x10x8xf32>
    %c0_7 = arith.constant 0 : index
    %c0_8 = arith.constant 0 : index
    %c0_9 = arith.constant 0 : index
    %c0_10 = arith.constant 0 : index
    %4 = vector.load %arg4[%c0_7, %c0_8, %c0_9, %c0_10] : memref<1x1x10x8xf32, #tpu.memory_space<vmem>>, vector<1x1x10x8xf32>
    %5 = vector.shape_cast %4 : vector<1x1x10x8xf32> to vector<1x10x8xf32>
    %6 = tpu.concatenate %1, %3, %5 in 0 : vector<8x10x8xf32>, vector<1x10x8xf32>, vector<1x10x8xf32> -> vector<10x10x8xf32>
    %7 = vector.extract_strided_slice %6 {offsets = [0, 0, 0], sizes = [8, 8, 8], strides = [1, 1, 1]} : vector<10x10x8xf32> to vector<8x8x8xf32>
    %8 = vector.shape_cast %7 : vector<8x8x8xf32> to vector<64x8xf32>
    %9 = vector.extract_strided_slice %6 {offsets = [0, 1, 0], sizes = [8, 8, 8], strides = [1, 1, 1]} : vector<10x10x8xf32> to vector<8x8x8xf32>
    %10 = vector.shape_cast %9 : vector<8x8x8xf32> to vector<64x8xf32>
    %11 = vector.extract_strided_slice %6 {offsets = [0, 2, 0], sizes = [8, 8, 8], strides = [1, 1, 1]} : vector<10x10x8xf32> to vector<8x8x8xf32>
    %12 = vector.shape_cast %11 : vector<8x8x8xf32> to vector<64x8xf32>
    %13 = vector.extract_strided_slice %6 {offsets = [1, 0, 0], sizes = [8, 8, 8], strides = [1, 1, 1]} : vector<10x10x8xf32> to vector<8x8x8xf32>
    %14 = vector.shape_cast %13 : vector<8x8x8xf32> to vector<64x8xf32>
    %15 = vector.extract_strided_slice %6 {offsets = [1, 1, 0], sizes = [8, 8, 8], strides = [1, 1, 1]} : vector<10x10x8xf32> to vector<8x8x8xf32>
    %16 = vector.shape_cast %15 : vector<8x8x8xf32> to vector<64x8xf32>
    %17 = vector.extract_strided_slice %6 {offsets = [1, 2, 0], sizes = [8, 8, 8], strides = [1, 1, 1]} : vector<10x10x8xf32> to vector<8x8x8xf32>
    %18 = vector.shape_cast %17 : vector<8x8x8xf32> to vector<64x8xf32>
    %19 = vector.extract_strided_slice %6 {offsets = [2, 0, 0], sizes = [8, 8, 8], strides = [1, 1, 1]} : vector<10x10x8xf32> to vector<8x8x8xf32>
    %20 = vector.shape_cast %19 : vector<8x8x8xf32> to vector<64x8xf32>
    %21 = vector.extract_strided_slice %6 {offsets = [2, 1, 0], sizes = [8, 8, 8], strides = [1, 1, 1]} : vector<10x10x8xf32> to vector<8x8x8xf32>
    %22 = vector.shape_cast %21 : vector<8x8x8xf32> to vector<64x8xf32>
    %23 = vector.extract_strided_slice %6 {offsets = [2, 2, 0], sizes = [8, 8, 8], strides = [1, 1, 1]} : vector<10x10x8xf32> to vector<8x8x8xf32>
    %24 = vector.shape_cast %23 : vector<8x8x8xf32> to vector<64x8xf32>
    %25 = tpu.concatenate %8, %10, %12, %14, %16, %18, %20, %22, %24 in 1 : vector<64x8xf32>, vector<64x8xf32>, vector<64x8xf32>, vector<64x8xf32>, vector<64x8xf32>, vector<64x8xf32>, vector<64x8xf32>, vector<64x8xf32>, vector<64x8xf32> -> vector<64x72xf32>
    %c0_11 = arith.constant 0 : index
    %c0_12 = arith.constant 0 : index
    %26 = vector.load %arg5[%c0_11, %c0_12] : memref<72x8xf32, #tpu.memory_space<vmem>>, vector<72x8xf32>
    %cst = arith.constant dense<0.000000e+00> : vector<64x8xf32>
    %27 = tpu.matmul %25, %26, %cst {dimension_numbers = #tpu.dot_dimension_numbers<[1], [0], [0], [1], [0, 0, 1, 1], [], []>} : vector<64x72xf32>, vector<72x8xf32>, vector<64x8xf32> -> vector<64x8xf32>
    %c0_13 = arith.constant 0 : index
    %c0_14 = arith.constant 0 : index
    %28 = vector.load %arg6[%c0_13, %c0_14] : memref<1x8xf32, #tpu.memory_space<vmem>>, vector<1x8xf32>
    %29 = vector.broadcast %28 : vector<1x8xf32> to vector<64x8xf32>
    %30 = arith.addf %27, %29 : vector<64x8xf32>
    %31 = vector.shape_cast %30 : vector<64x8xf32> to vector<8x8x8xf32>
    %c0_15 = arith.constant 0 : index
    %c0_16 = arith.constant 0 : index
    %c0_17 = arith.constant 0 : index
    %c0_18 = arith.constant 0 : index
    %32 = vector.load %arg7[%c0_15, %c0_16, %c0_17, %c0_18] : memref<1x8x8x8xf32, #tpu.memory_space<vmem>>, vector<1x8x8x8xf32>
    %33 = vector.shape_cast %32 : vector<1x8x8x8xf32> to vector<8x8x8xf32>
    %34 = vector.shape_cast %31 : vector<8x8x8xf32> to vector<1x8x8x8xf32>
    tpu.vector_store %arg7[%c0_15, %c0_16, %c0_17, %c0_18], %34 {strides = array<i32>} : memref<1x8x8x8xf32, #tpu.memory_space<vmem>>, vector<1x8x8x8xf32>,
    %cst_19 = arith.constant dense<0.000000e+00> : vector<8xf32>
    %35 = vector.multi_reduction <add>, %30, %cst_19 [0] : vector<64x8xf32> to vector<8xf32>
    %36 = vector.shape_cast %35 : vector<8xf32> to vector<1x8xf32>
    %37 = arith.mulf %30, %30 : vector<64x8xf32>
    %cst_20 = arith.constant dense<0.000000e+00> : vector<8xf32>
    %38 = vector.multi_reduction <add>, %37, %cst_20 [0] : vector<64x8xf32> to vector<8xf32>
    %39 = vector.shape_cast %38 : vector<8xf32> to vector<1x8xf32>
    %40 = tpu.concatenate %36, %39 in 0 : vector<1x8xf32>, vector<1x8xf32> -> vector<2x8xf32>
    %c0_i32 = arith.constant 0 : i32
    %41 = arith.cmpi eq, %arg1, %c0_i32 : i32
    %42 = arith.extui %41 : i1 to i32
    %c0_i32_21 = arith.constant 0 : i32
    %43 = arith.cmpi ne, %42, %c0_i32_21 : i32
    scf.if %43 {
      %c0_24 = arith.constant 0 : index
      %c0_25 = arith.constant 0 : index
      %c0_26 = arith.constant 0 : index
      %47 = vector.load %arg8[%c0_24, %c0_25, %c0_26] : memref<1x2x8xf32, #tpu.memory_space<vmem>>, vector<1x2x8xf32>
      %48 = vector.shape_cast %47 : vector<1x2x8xf32> to vector<2x8xf32>
      %49 = vector.shape_cast %40 : vector<2x8xf32> to vector<1x2x8xf32>
      tpu.vector_store %arg8[%c0_24, %c0_25, %c0_26], %49 {strides = array<i32>} : memref<1x2x8xf32, #tpu.memory_space<vmem>>, vector<1x2x8xf32>,
    } else {
    }
    %c0_i32_22 = arith.constant 0 : i32
    %44 = arith.cmpi ne, %arg1, %c0_i32_22 : i32
    %45 = arith.extui %44 : i1 to i32
    %c0_i32_23 = arith.constant 0 : i32
    %46 = arith.cmpi ne, %45, %c0_i32_23 : i32
    scf.if %46 {
      %c0_24 = arith.constant 0 : index
      %c0_25 = arith.constant 0 : index
      %c0_26 = arith.constant 0 : index
      %47 = vector.load %arg8[%c0_24, %c0_25, %c0_26] : memref<1x2x8xf32, #tpu.memory_space<vmem>>, vector<1x2x8xf32>
      %48 = vector.shape_cast %47 : vector<1x2x8xf32> to vector<2x8xf32>
      %49 = arith.addf %48, %40 : vector<2x8xf32>
      %c0_27 = arith.constant 0 : index
      %c0_28 = arith.constant 0 : index
      %c0_29 = arith.constant 0 : index
      %50 = vector.load %arg8[%c0_27, %c0_28, %c0_29] : memref<1x2x8xf32, #tpu.memory_space<vmem>>, vector<1x2x8xf32>
      %51 = vector.shape_cast %50 : vector<1x2x8xf32> to vector<2x8xf32>
      %52 = vector.shape_cast %49 : vector<2x8xf32> to vector<1x2x8xf32>
      tpu.vector_store %arg8[%c0_27, %c0_28, %c0_29], %52 {strides = array<i32>} : memref<1x2x8xf32, #tpu.memory_space<vmem>>, vector<1x2x8xf32>,
    } else {
    }
    return
  }
  func.func @transform_0(%arg0: i32, %arg1: i32) -> (i32, i32, i32, i32) {
    %c0_i32 = arith.constant 0 : i32
    %c0_i32_0 = arith.constant 0 : i32
    %c0_i32_1 = arith.constant 0 : i32
    return %arg0, %arg1, %c0_i32, %c0_i32_0 : i32, i32, i32, i32
  }
  func.func @transform_1(%arg0: i32, %arg1: i32) -> (i32, i32, i32, i32) {
    %c1_i32 = arith.constant 1 : i32
    %0 = arith.addi %arg1, %c1_i32 : i32
    %c8_i32 = arith.constant 8 : i32
    %1 = arith.muli %0, %c8_i32 : i32
    %c0_i32 = arith.constant 0 : i32
    %c0_i32_0 = arith.constant 0 : i32
    %c0_i32_1 = arith.constant 0 : i32
    return %arg0, %1, %c0_i32, %c0_i32_0 : i32, i32, i32, i32
  }
  func.func @transform_2(%arg0: i32, %arg1: i32) -> (i32, i32, i32, i32) {
    %c1_i32 = arith.constant 1 : i32
    %0 = arith.addi %arg1, %c1_i32 : i32
    %c8_i32 = arith.constant 8 : i32
    %1 = arith.muli %0, %c8_i32 : i32
    %c1_i32_0 = arith.constant 1 : i32
    %2 = arith.addi %1, %c1_i32_0 : i32
    %c0_i32 = arith.constant 0 : i32
    %c0_i32_1 = arith.constant 0 : i32
    %c0_i32_2 = arith.constant 0 : i32
    return %arg0, %2, %c0_i32, %c0_i32_1 : i32, i32, i32, i32
  }
  func.func @transform_3(%arg0: i32, %arg1: i32) -> (i32, i32) {
    %c0_i32 = arith.constant 0 : i32
    %c0_i32_0 = arith.constant 0 : i32
    %c0_i32_1 = arith.constant 0 : i32
    return %c0_i32, %c0_i32_0 : i32, i32
  }
  func.func @transform_4(%arg0: i32, %arg1: i32) -> (i32, i32) {
    %c0_i32 = arith.constant 0 : i32
    %c0_i32_0 = arith.constant 0 : i32
    %c0_i32_1 = arith.constant 0 : i32
    return %c0_i32, %c0_i32_0 : i32, i32
  }
  func.func @transform_5(%arg0: i32, %arg1: i32) -> (i32, i32, i32, i32) {
    %c0_i32 = arith.constant 0 : i32
    %c0_i32_0 = arith.constant 0 : i32
    %c0_i32_1 = arith.constant 0 : i32
    return %arg0, %arg1, %c0_i32, %c0_i32_0 : i32, i32, i32, i32
  }
  func.func @transform_6(%arg0: i32, %arg1: i32) -> (i32, i32, i32) {
    %c0_i32 = arith.constant 0 : i32
    %c0_i32_0 = arith.constant 0 : i32
    %c0_i32_1 = arith.constant 0 : i32
    return %arg0, %c0_i32, %c0_i32_0 : i32, i32, i32
  }
}

</mosaic_0001>

<llo_original>
// kernel: down_lpf_forward.5
$region0: #{down_lpf_forward.5}
  #allocation0 [shape = 'u32[]', space=smem, size = 0x4, offset = 0x4, fixed_abs, tag = 'smem constant byte address 0x4 - core index']
  #allocation1 [shape = 'u32[72,128]{1,0:T(1,128)}', space=vmem, size = 0x9000, scoped, tag = 'internal scratch']
  %s0 = inlined_call_operand.vmem [shape: f32[2,8,2,8,8], index: 0, kind: input, shape index: {}]
  %s1 = inlined_call_operand.vmem [shape: f32[2,8,8,4], index: 1, kind: output, shape index: {}]
  %s2 = sld [smem:[#allocation0]]
  $region37: #{down_lpf_forward.5} parent=0
    _
  %s4 = ssub.s32 1, %s2
  %s5 = scalar_select 0, %s4, %s2
  loop: start=0, step=1, limit=4
  $region2: #{down_lpf_forward.5} parent=0 // loop_pre_header
    _
  $region3: #{down_lpf_forward.5} parent=0 // loop_header
    %s7 = sphi 0, %s11
    %p8 = scmp.ge.s32.totalorder %s7, 4
    %s14 = sphi 0, %s26
    %s15 = sphi 0, %s22
    %s16 = sphi 0, %s14
    %s17 = sphi 0, %s15
    %s18 = sphi 0, %s16
    %s19 = sphi 0, %s17
    %s31 = sphi 0, %s33
    %s34 = sphi 0, %s31
    %s35 = sphi 0, %s34
    %s51 = sphi 0, %s35
    %s59 = sphi 0, %s61
    %s62 = sphi 0, %s59
    %s63 = sphi 0, %s62
    %s79 = sphi 0, %s63
  $region4: #{down_lpf_forward.5} parent=0 // loop_header_branch
    %10 = sbr.rel (%p8) target = $region8
  $region5: #{down_lpf_forward.5} parent=0 // loop_body
    %s12 = ssub.s32 %s7, 1
    %s13 = ssub.s32 %s7, 2
    %s20 = sadd.s32 1, %s15
    %p21 = scmp.ge.s32.totalorder %s20, 1
    %s22 = scalar_select %p21, 0, %s20
    %s23 = sadd.s32 1, %s14
    %s24 = scalar_select %p21, %s23, %s14
    %p25 = scmp.ge.s32.totalorder %s24, 2
    %s26 = scalar_select %p25, 0, %s24
    %s27 = ssub.s32 %s14, %s26
    %s28 = ssub.s32 %s15, %s22
    %s29 = sor.u32 %s27, %s28
    %p30 = scmp.eq.s32.totalorder %s29, 0
    %s32 = sadd.s32 %s31, 1
    %s33 = scalar_select %p30, %s31, %s32
    %p36 = pneg %p30
    %p37 = scmp.eq.s32.totalorder %s7, 1
    %p38 = por %p36, %p37
    %p39 = scmp.ne.s32.totalorder %s31, %s34
    %p40 = scmp.eq.s32.totalorder %s7, 0
    %p41 = por %p39, %p40
    %p42 = scmp.ne.s32.totalorder %s31, %s34
    %p43 = scmp.eq.s32.totalorder %s12, 1
    %p44 = por %p42, %p43
    %p45 = scmp.ne.s32.totalorder %s34, %s35
    %p46 = scmp.eq.s32.totalorder %s12, 0
    %p47 = por %p45, %p46
    %p48 = scmp.ne.s32.totalorder %s34, %s35
    %p49 = scmp.eq.s32.totalorder %s13, 1
    %p50 = por %p48, %p49
    %p52 = scmp.ne.s32.totalorder %s35, %s51
    %p53 = scmp.eq.s32.totalorder %s13, 0
    %p54 = por %p52, %p53
    %s55 = ssub.s32 %s14, %s26
    %s56 = ssub.s32 %s15, %s22
    %s57 = sor.u32 %s55, %s56
    %p58 = scmp.eq.s32.totalorder %s57, 0
    %s60 = sadd.s32 %s59, 1
    %s61 = scalar_select %p58, %s59, %s60
    %p64 = pneg %p58
    %p65 = scmp.eq.s32.totalorder %s7, 1
    %p66 = por %p64, %p65
    %p67 = scmp.ne.s32.totalorder %s59, %s62
    %p68 = scmp.eq.s32.totalorder %s7, 0
    %p69 = por %p67, %p68
    %p70 = scmp.ne.s32.totalorder %s59, %s62
    %p71 = scmp.eq.s32.totalorder %s12, 1
    %p72 = por %p70, %p71
    %p73 = scmp.ne.s32.totalorder %s62, %s63
    %p74 = scmp.eq.s32.totalorder %s12, 0
    %p75 = por %p73, %p74
    %p76 = scmp.ne.s32.totalorder %s62, %s63
    %p77 = scmp.eq.s32.totalorder %s13, 1
    %p78 = por %p76, %p77
    %p80 = scmp.ne.s32.totalorder %s63, %s79
    %p81 = scmp.eq.s32.totalorder %s13, 0
    %p82 = por %p80, %p81
    %p83 = scmp.le.s32.totalorder 1, %s7
    %p84 = scmp.lt.s32.totalorder %s7, 3
    %p85 = pnand %p83, %p84
    %p86 = pneg %p85
    // Predicated region
    $region9: #{down_lpf_forward.5} parent=5 // pred_check
      _
    $region10: #{down_lpf_forward.5} parent=5 // pred_check_branch
      %88 = sbr.rel (%p85) target = $region12
    $region11: #{down_lpf_forward.5} parent=5 // pred_region
      %s89 = ssub.s32 %s7, 1
    $region12: #{down_lpf_forward.5} parent=5 // pred_fallthru
      _
    %p90 = scmp.lt.s32.totalorder %s7, 2
    // Predicated region
    $region13: #{down_lpf_forward.5} parent=5 // pred_check
      %p91 = pneg %p90
    $region14: #{down_lpf_forward.5} parent=5 // pred_check_branch
      %93 = sbr.rel (%p91) target = $region16
    $region15: #{down_lpf_forward.5} parent=5 // pred_region
      // Predicated region
      $region17: #{down_lpf_forward.5} parent=15 // pred_check
        %p94 = pneg %p41
      $region18: #{down_lpf_forward.5} parent=15 // pred_check_branch
        %96 = sbr.rel (%p94) target = $region20
      $region19: #{down_lpf_forward.5} parent=15 // pred_region
        %s97 = smul.u32 8, %s15
        %p98 = scmp.lt.s32.totalorder %s14, 1
        %s99 = scalar_select %p98, %s14, 1
        %p100 = scmp.lt.s32.totalorder %s97, 7
        %s101 = scalar_select %p100, %s97, 7
        %s102 = smul.addr %s101, 2
        %s103 = smul.addr %s99, 16
        %s104 = sadd.s32 %s102, %s103
        %s105 = smul.addr %s104, 8
        %s106 = scalar_lea.vmem %s0, %s105
        %s107 = smul.u32 8, %s15
      $region20: #{down_lpf_forward.5} parent=15 // pred_fallthru
        _
    $region16: #{down_lpf_forward.5} parent=5 // pred_fallthru
      _
    %p108 = scmp.le.s32.totalorder 1, %s7
    %p109 = scmp.lt.s32.totalorder %s7, 3
    %p110 = pnand %p108, %p109
    %p111 = pneg %p110
    // Predicated region
    $region21: #{down_lpf_forward.5} parent=5 // pred_check
      _
    $region22: #{down_lpf_forward.5} parent=5 // pred_check_branch
      %113 = sbr.rel (%p110) target = $region24
    $region23: #{down_lpf_forward.5} parent=5 // pred_region
      %s114 = ssub.s32 %s7, 1
      %s115 = smul.u32 8, %s17
      %p116 = scmp.lt.s32.totalorder %s16, 1
      %s117 = scalar_select %p116, %s16, 1
      %p118 = scmp.lt.s32.totalorder %s115, 7
      %s119 = scalar_select %p118, %s115, 7
      %s120 = smul.addr %s119, 2
      %s121 = smul.addr %s117, 16
      %s122 = sadd.s32 %s120, %s121
      %s123 = smul.addr %s122, 8
      %s124 = scalar_lea.vmem %s0, %s123
      %p125 = pneg %p47
      %p126 = pneg %p44
      %p127 = pneg %p75
      %p128 = pneg %p72
      %s129 = smul.u32 8, %s17
      %p130 = scmp.lt.s32.totalorder %s16, 1
      %s131 = scalar_select %p130, %s16, 1
      %p132 = scmp.lt.s32.totalorder %s129, 7
      %s133 = scalar_select %p132, %s129, 7
      %s134 = smul.addr %s131, 8
      %s135 = sadd.s32 %s133, %s134
      %s136 = smul.addr %s135, 8
      %s137 = scalar_lea.vmem %s1, %s136
      %s138 = smul.u32 8, %s17
      %p139 = scmp.lt.s32.totalorder %s16, 1
      %s140 = scalar_select %p139, %s16, 1
      %p141 = scmp.lt.s32.totalorder %s138, 7
      %s142 = scalar_select %p141, %s138, 7
      %s143 = smul.addr %s142, 2
      %s144 = smul.addr %s140, 16
      %s145 = sadd.s32 %s143, %s144
      %s146 = smul.addr %s145, 8
      %s147 = scalar_lea.vmem %s0, %s146
      %s148 = smul.u32 8, %s17
      %s149 = smul.u32 8, %s17
      %p150 = scmp.lt.s32.totalorder %s16, 1
      %s151 = scalar_select %p150, %s16, 1
      %p152 = scmp.lt.s32.totalorder %s149, 7
      %s153 = scalar_select %p152, %s149, 7
      %s154 = smul.addr %s151, 8
      %s155 = sadd.s32 %s153, %s154
      %s156 = smul.addr %s155, 8
      %s157 = scalar_lea.vmem %s1, %s156
      %s158 = smul.u32 8, %s17
      %v159 = vld [vmem:[%s147] sm:$0xff]
      %v160 = vld [vmem:[%s147 + $0x8] sm:$0xff]
      %v161 = vld [vmem:[%s147 + $0x10] sm:$0xff]
      %v162 = vld [vmem:[%s147 + $0x18] sm:$0xff]
      %v163 = vld [vmem:[%s147 + $0x20] sm:$0xff]
      %v164 = vld [vmem:[%s147 + $0x28] sm:$0xff]
      %v165 = vld [vmem:[%s147 + $0x30] sm:$0xff]
      %v166 = vld [vmem:[%s147 + $0x38] sm:$0xff]
      %v167 = vld [vmem:[%s147 + $0x40] sm:$0xff]
      %v168 = vld [vmem:[%s147 + $0x48] sm:$0xff]
      %v169 = vld [vmem:[%s147 + $0x50] sm:$0xff]
      %v170 = vld [vmem:[%s147 + $0x58] sm:$0xff]
      %v171 = vld [vmem:[%s147 + $0x60] sm:$0xff]
      %v172 = vld [vmem:[%s147 + $0x68] sm:$0xff]
      %v173 = vld [vmem:[%s147 + $0x70] sm:$0xff]
      %v174 = vld [vmem:[%s147 + $0x78] sm:$0xff]
      %v175 = vadd.f32 %v159, %v160
      %v176 = vadd.f32 %v161, %v162
      %v177 = vadd.f32 %v163, %v164
      %v178 = vadd.f32 %v165, %v166
      %v179 = vadd.f32 %v167, %v168
      %v180 = vadd.f32 %v169, %v170
      %v181 = vadd.f32 %v171, %v172
      %v182 = vadd.f32 %v173, %v174
      %191 = vrot.lane.b32.xlu0 %v175, 124
      %v192 = vpop.permute.xlu0 %191
      %193 = vrot.lane.b32.xlu0 %v176, 124
      %v194 = vpop.permute.xlu0 %193
      %195 = vrot.lane.b32.xlu0 %v177, 124
      %v196 = vpop.permute.xlu0 %195
      %197 = vrot.lane.b32.xlu0 %v178, 124
      %v198 = vpop.permute.xlu0 %197
      %199 = vrot.lane.b32.xlu0 %v179, 124
      %v200 = vpop.permute.xlu0 %199
      %201 = vrot.lane.b32.xlu0 %v180, 124
      %v202 = vpop.permute.xlu0 %201
      %203 = vrot.lane.b32.xlu0 %v181, 124
      %v204 = vpop.permute.xlu0 %203
      %205 = vrot.lane.b32.xlu0 %v182, 124
      %v206 = vpop.permute.xlu0 %205
      %v215 = vadd.f32 %v175, %v192
      %v216 = vadd.f32 %v176, %v194
      %v217 = vadd.f32 %v177, %v196
      %v218 = vadd.f32 %v178, %v198
      %v219 = vadd.f32 %v179, %v200
      %v220 = vadd.f32 %v180, %v202
      %v221 = vadd.f32 %v181, %v204
      %v222 = vadd.f32 %v182, %v206
      %v223 = vmul.f32 %v215, 0.25
      %v224 = vmul.f32 %v216, 0.25
      %v225 = vmul.f32 %v217, 0.25
      %v226 = vmul.f32 %v218, 0.25
      %v227 = vmul.f32 %v219, 0.25
      %v228 = vmul.f32 %v220, 0.25
      %v229 = vmul.f32 %v221, 0.25
      %v230 = vmul.f32 %v222, 0.25
      %vm231 = vcmask 31744
      %232 = vst.msk [vmem:[%s157] sm:$0xff] %vm231, %v223
      %233 = vst.msk [vmem:[%s157 + $0x8] sm:$0xff] %vm231, %v224
      %234 = vst.msk [vmem:[%s157 + $0x10] sm:$0xff] %vm231, %v225
      %235 = vst.msk [vmem:[%s157 + $0x18] sm:$0xff] %vm231, %v226
      %236 = vst.msk [vmem:[%s157 + $0x20] sm:$0xff] %vm231, %v227
      %237 = vst.msk [vmem:[%s157 + $0x28] sm:$0xff] %vm231, %v228
      %238 = vst.msk [vmem:[%s157 + $0x30] sm:$0xff] %vm231, %v229
      %239 = vst.msk [vmem:[%s157 + $0x38] sm:$0xff] %vm231, %v230
      %s240 = smul.u32 8, %s17
      %p241 = scmp.lt.s32.totalorder %s16, 1
      %s242 = scalar_select %p241, %s16, 1
      %p243 = scmp.lt.s32.totalorder %s240, 7
      %s244 = scalar_select %p243, %s240, 7
      %s245 = smul.addr %s242, 8
      %s246 = sadd.s32 %s244, %s245
      %s247 = smul.addr %s246, 8
      %s248 = scalar_lea.vmem %s1, %s247
      // Predicated region
      $region25: #{down_lpf_forward.5} parent=23 // pred_check
        %p249 = pneg %p72
      $region26: #{down_lpf_forward.5} parent=23 // pred_check_branch
        %251 = sbr.rel (%p249) target = $region28
      $region27: #{down_lpf_forward.5} parent=23 // pred_region
        %s252 = smul.u32 8, %s17
      $region28: #{down_lpf_forward.5} parent=23 // pred_fallthru
        _
    $region24: #{down_lpf_forward.5} parent=5 // pred_fallthru
      _
    %p253 = scmp.le.s32.totalorder 2, %s7
    // Predicated region
    $region29: #{down_lpf_forward.5} parent=5 // pred_check
      %p254 = pneg %p253
    $region30: #{down_lpf_forward.5} parent=5 // pred_check_branch
      %256 = sbr.rel (%p254) target = $region32
    $region31: #{down_lpf_forward.5} parent=5 // pred_region
      %s257 = ssub.s32 %s7, 2
      // Predicated region
      $region33: #{down_lpf_forward.5} parent=31 // pred_check
        %p258 = pneg %p78
      $region34: #{down_lpf_forward.5} parent=31 // pred_check_branch
        %260 = sbr.rel (%p258) target = $region36
      $region35: #{down_lpf_forward.5} parent=31 // pred_region
        %s261 = smul.u32 8, %s19
        %p262 = scmp.lt.s32.totalorder %s18, 1
        %s263 = scalar_select %p262, %s18, 1
        %p264 = scmp.lt.s32.totalorder %s261, 7
        %s265 = scalar_select %p264, %s261, 7
        %s266 = smul.addr %s263, 8
        %s267 = sadd.s32 %s265, %s266
        %s268 = smul.addr %s267, 8
        %s269 = scalar_lea.vmem %s1, %s268
      $region36: #{down_lpf_forward.5} parent=31 // pred_fallthru
        _
    $region32: #{down_lpf_forward.5} parent=5 // pred_fallthru
      _
  $region6: #{down_lpf_forward.5} parent=0 // loop_footer
    %s11 = sadd.s32 1, %s7
  $region7: #{down_lpf_forward.5} parent=0 // loop_footer_branch
    %6 = sbr.rel target = $region3
  $region8: #{down_lpf_forward.5} parent=0 // loop_exit
    _

// kernel: down_lpf_forward.7
$region0: #{down_lpf_forward.7}
  #allocation0 [shape = 'u32[]', space=smem, size = 0x4, offset = 0x4, fixed_abs, tag = 'smem constant byte address 0x4 - core index']
  #allocation1 [shape = 'u32[72,128]{1,0:T(1,128)}', space=vmem, size = 0x9000, scoped, tag = 'internal scratch']
  %s0 = inlined_call_operand.vmem [shape: f32[2,8,8,8], index: 0, kind: input, shape index: {}]
  %s1 = inlined_call_operand.vmem [shape: f32[1,8], index: 1, kind: input, shape index: {}]
  %s2 = inlined_call_operand.vmem [shape: f32[1,8], index: 2, kind: input, shape index: {}]
  %s3 = inlined_call_operand.vmem [shape: f32[2,8,8,8], index: 3, kind: output, shape index: {}]
  %s4 = sld [smem:[#allocation0]]
  $region45: #{down_lpf_forward.7} parent=0
    _
  %s6 = ssub.s32 1, %s4
  %s7 = scalar_select 0, %s6, %s4
  loop: start=0, step=1, limit=4
  $region2: #{down_lpf_forward.7} parent=0 // loop_pre_header
    _
  $region3: #{down_lpf_forward.7} parent=0 // loop_header
    %s9 = sphi 0, %s13
    %p10 = scmp.ge.s32.totalorder %s9, 4
    %s16 = sphi 0, %s28
    %s17 = sphi 0, %s24
    %s18 = sphi 0, %s16
    %s19 = sphi 0, %s17
    %s20 = sphi 0, %s18
    %s21 = sphi 0, %s19
    %s33 = sphi 0, %s35
    %s36 = sphi 0, %s33
    %s37 = sphi 0, %s36
    %s53 = sphi 0, %s37
    %s57 = sphi 0, %s57
    %s59 = sphi 0, %s57
    %s60 = sphi 0, %s59
    %s74 = sphi 0, %s60
    %s78 = sphi 0, %s78
    %s80 = sphi 0, %s78
    %s81 = sphi 0, %s80
    %s95 = sphi 0, %s81
    %s103 = sphi 0, %s105
    %s106 = sphi 0, %s103
    %s107 = sphi 0, %s106
    %s123 = sphi 0, %s107
  $region4: #{down_lpf_forward.7} parent=0 // loop_header_branch
    %12 = sbr.rel (%p10) target = $region8
  $region5: #{down_lpf_forward.7} parent=0 // loop_body
    %s14 = ssub.s32 %s9, 1
    %s15 = ssub.s32 %s9, 2
    %s22 = sadd.s32 1, %s17
    %p23 = scmp.ge.s32.totalorder %s22, 1
    %s24 = scalar_select %p23, 0, %s22
    %s25 = sadd.s32 1, %s16
    %s26 = scalar_select %p23, %s25, %s16
    %p27 = scmp.ge.s32.totalorder %s26, 2
    %s28 = scalar_select %p27, 0, %s26
    %s29 = ssub.s32 %s16, %s28
    %s30 = ssub.s32 %s17, %s24
    %s31 = sor.u32 %s29, %s30
    %p32 = scmp.eq.s32.totalorder %s31, 0
    %s34 = sadd.s32 %s33, 1
    %s35 = scalar_select %p32, %s33, %s34
    %p38 = pneg %p32
    %p39 = scmp.eq.s32.totalorder %s9, 1
    %p40 = por %p38, %p39
    %p41 = scmp.ne.s32.totalorder %s33, %s36
    %p42 = scmp.eq.s32.totalorder %s9, 0
    %p43 = por %p41, %p42
    %p44 = scmp.ne.s32.totalorder %s33, %s36
    %p45 = scmp.eq.s32.totalorder %s14, 1
    %p46 = por %p44, %p45
    %p47 = scmp.ne.s32.totalorder %s36, %s37
    %p48 = scmp.eq.s32.totalorder %s14, 0
    %p49 = por %p47, %p48
    %p50 = scmp.ne.s32.totalorder %s36, %s37
    %p51 = scmp.eq.s32.totalorder %s15, 1
    %p52 = por %p50, %p51
    %p54 = scmp.ne.s32.totalorder %s37, %s53
    %p55 = scmp.eq.s32.totalorder %s15, 0
    %p56 = por %p54, %p55
    %s58 = sadd.s32 %s57, 1
    %p61 = scmp.eq.s32.totalorder %s9, 1
    %p62 = scmp.ne.s32.totalorder %s57, %s59
    %p63 = scmp.eq.s32.totalorder %s9, 0
    %p64 = por %p62, %p63
    %p65 = scmp.ne.s32.totalorder %s57, %s59
    %p66 = scmp.eq.s32.totalorder %s14, 1
    %p67 = por %p65, %p66
    %p68 = scmp.ne.s32.totalorder %s59, %s60
    %p69 = scmp.eq.s32.totalorder %s14, 0
    %p70 = por %p68, %p69
    %p71 = scmp.ne.s32.totalorder %s59, %s60
    %p72 = scmp.eq.s32.totalorder %s15, 1
    %p73 = por %p71, %p72
    %p75 = scmp.ne.s32.totalorder %s60, %s74
    %p76 = scmp.eq.s32.totalorder %s15, 0
    %p77 = por %p75, %p76
    %s79 = sadd.s32 %s78, 1
    %p82 = scmp.eq.s32.totalorder %s9, 1
    %p83 = scmp.ne.s32.totalorder %s78, %s80
    %p84 = scmp.eq.s32.totalorder %s9, 0
    %p85 = por %p83, %p84
    %p86 = scmp.ne.s32.totalorder %s78, %s80
    %p87 = scmp.eq.s32.totalorder %s14, 1
    %p88 = por %p86, %p87
    %p89 = scmp.ne.s32.totalorder %s80, %s81
    %p90 = scmp.eq.s32.totalorder %s14, 0
    %p91 = por %p89, %p90
    %p92 = scmp.ne.s32.totalorder %s80, %s81
    %p93 = scmp.eq.s32.totalorder %s15, 1
    %p94 = por %p92, %p93
    %p96 = scmp.ne.s32.totalorder %s81, %s95
    %p97 = scmp.eq.s32.totalorder %s15, 0
    %p98 = por %p96, %p97
    %s99 = ssub.s32 %s16, %s28
    %s100 = ssub.s32 %s17, %s24
    %s101 = sor.u32 %s99, %s100
    %p102 = scmp.eq.s32.totalorder %s101, 0
    %s104 = sadd.s32 %s103, 1
    %s105 = scalar_select %p102, %s103, %s104
    %p108 = pneg %p102
    %p109 = scmp.eq.s32.totalorder %s9, 1
    %p110 = por %p108, %p109
    %p111 = scmp.ne.s32.totalorder %s103, %s106
    %p112 = scmp.eq.s32.totalorder %s9, 0
    %p113 = por %p111, %p112
    %p114 = scmp.ne.s32.totalorder %s103, %s106
    %p115 = scmp.eq.s32.totalorder %s14, 1
    %p116 = por %p114, %p115
    %p117 = scmp.ne.s32.totalorder %s106, %s107
    %p118 = scmp.eq.s32.totalorder %s14, 0
    %p119 = por %p117, %p118
    %p120 = scmp.ne.s32.totalorder %s106, %s107
    %p121 = scmp.eq.s32.totalorder %s15, 1
    %p122 = por %p120, %p121
    %p124 = scmp.ne.s32.totalorder %s107, %s123
    %p125 = scmp.eq.s32.totalorder %s15, 0
    %p126 = por %p124, %p125
    %p127 = scmp.le.s32.totalorder 1, %s9
    %p128 = scmp.lt.s32.totalorder %s9, 3
    %p129 = pnand %p127, %p128
    %p130 = pneg %p129
    // Predicated region
    $region9: #{down_lpf_forward.7} parent=5 // pred_check
      _
    $region10: #{down_lpf_forward.7} parent=5 // pred_check_branch
      %132 = sbr.rel (%p129) target = $region12
    $region11: #{down_lpf_forward.7} parent=5 // pred_region
      %s133 = ssub.s32 %s9, 1
      // Predicated region
      $region13: #{down_lpf_forward.7} parent=11 // pred_check
        %p134 = pneg %p70
      $region14: #{down_lpf_forward.7} parent=11 // pred_check_branch
        %136 = sbr.rel (%p134) target = $region16
      $region15: #{down_lpf_forward.7} parent=11 // pred_region
        _
      $region16: #{down_lpf_forward.7} parent=11 // pred_fallthru
        _
      // Predicated region
      $region17: #{down_lpf_forward.7} parent=11 // pred_check
        %p137 = pneg %p91
      $region18: #{down_lpf_forward.7} parent=11 // pred_check_branch
        %139 = sbr.rel (%p137) target = $region20
      $region19: #{down_lpf_forward.7} parent=11 // pred_region
        _
      $region20: #{down_lpf_forward.7} parent=11 // pred_fallthru
        _
    $region12: #{down_lpf_forward.7} parent=5 // pred_fallthru
      _
    %p140 = scmp.lt.s32.totalorder %s9, 2
    // Predicated region
    $region21: #{down_lpf_forward.7} parent=5 // pred_check
      %p141 = pneg %p140
    $region22: #{down_lpf_forward.7} parent=5 // pred_check_branch
      %143 = sbr.rel (%p141) target = $region24
    $region23: #{down_lpf_forward.7} parent=5 // pred_region
      // Predicated region
      $region25: #{down_lpf_forward.7} parent=23 // pred_check
        %p144 = pneg %p43
      $region26: #{down_lpf_forward.7} parent=23 // pred_check_branch
        %146 = sbr.rel (%p144) target = $region28
      $region27: #{down_lpf_forward.7} parent=23 // pred_region
        %s147 = smul.u32 8, %s17
        %p148 = scmp.lt.s32.totalorder %s16, 1
        %s149 = scalar_select %p148, %s16, 1
        %p150 = scmp.lt.s32.totalorder %s147, 7
        %s151 = scalar_select %p150, %s147, 7
        %s152 = smul.addr %s149, 8
        %s153 = sadd.s32 %s151, %s152
        %s154 = smul.addr %s153, 8
        %s155 = scalar_lea.vmem %s0, %s154
        %s156 = smul.u32 8, %s17
      $region28: #{down_lpf_forward.7} parent=23 // pred_fallthru
        _
    $region24: #{down_lpf_forward.7} parent=5 // pred_fallthru
      _
    %p157 = scmp.le.s32.totalorder 1, %s9
    %p158 = scmp.lt.s32.totalorder %s9, 3
    %p159 = pnand %p157, %p158
    %p160 = pneg %p159
    // Predicated region
    $region29: #{down_lpf_forward.7} parent=5 // pred_check
      _
    $region30: #{down_lpf_forward.7} parent=5 // pred_check_branch
      %162 = sbr.rel (%p159) target = $region32
    $region31: #{down_lpf_forward.7} parent=5 // pred_region
      %s163 = ssub.s32 %s9, 1
      %s164 = smul.u32 8, %s19
      %p165 = scmp.lt.s32.totalorder %s18, 1
      %s166 = scalar_select %p165, %s18, 1
      %p167 = scmp.lt.s32.totalorder %s164, 7
      %s168 = scalar_select %p167, %s164, 7
      %s169 = smul.addr %s166, 8
      %s170 = sadd.s32 %s168, %s169
      %s171 = smul.addr %s170, 8
      %s172 = scalar_lea.vmem %s0, %s171
      %p173 = pneg %p49
      %p174 = pneg %p46
      %p175 = pneg %p70
      %p176 = pneg %p67
      %p177 = pneg %p91
      %p178 = pneg %p88
      %p179 = pneg %p119
      %p180 = pneg %p116
      %s181 = smul.u32 8, %s19
      %p182 = scmp.lt.s32.totalorder %s18, 1
      %s183 = scalar_select %p182, %s18, 1
      %p184 = scmp.lt.s32.totalorder %s181, 7
      %s185 = scalar_select %p184, %s181, 7
      %s186 = smul.addr %s183, 8
      %s187 = sadd.s32 %s185, %s186
      %s188 = smul.addr %s187, 8
      %s189 = scalar_lea.vmem %s3, %s188
      %s190 = smul.u32 8, %s19
      %p191 = scmp.lt.s32.totalorder %s18, 1
      %s192 = scalar_select %p191, %s18, 1
      %p193 = scmp.lt.s32.totalorder %s190, 7
      %s194 = scalar_select %p193, %s190, 7
      %s195 = smul.addr %s192, 8
      %s196 = sadd.s32 %s194, %s195
      %s197 = smul.addr %s196, 8
      %s198 = scalar_lea.vmem %s0, %s197
      %s199 = smul.u32 8, %s19
      %s200 = smul.u32 8, %s19
      %p201 = scmp.lt.s32.totalorder %s18, 1
      %s202 = scalar_select %p201, %s18, 1
      %p203 = scmp.lt.s32.totalorder %s200, 7
      %s204 = scalar_select %p203, %s200, 7
      %s205 = smul.addr %s202, 8
      %s206 = sadd.s32 %s204, %s205
      %s207 = smul.addr %s206, 8
      %s208 = scalar_lea.vmem %s3, %s207
      %s209 = smul.u32 8, %s19
      %v210 = vld [vmem:[%s198] sm:$0xff]
      %v211 = vld [vmem:[%s198 + $0x8] sm:$0xff]
      %v212 = vld [vmem:[%s198 + $0x10] sm:$0xff]
      %v213 = vld [vmem:[%s198 + $0x18] sm:$0xff]
      %v214 = vld [vmem:[%s198 + $0x20] sm:$0xff]
      %v215 = vld [vmem:[%s198 + $0x28] sm:$0xff]
      %v216 = vld [vmem:[%s198 + $0x30] sm:$0xff]
      %v217 = vld [vmem:[%s198 + $0x38] sm:$0xff]
      %v218 = vld [vmem:[%s1] sm:$0x1]
      %v220 = vperm.slane %v218, 0
      %v222 = vmul.f32 %v210, %v220
      %v223 = vmul.f32 %v211, %v220
      %v224 = vmul.f32 %v212, %v220
      %v225 = vmul.f32 %v213, %v220
      %v226 = vmul.f32 %v214, %v220
      %v227 = vmul.f32 %v215, %v220
      %v228 = vmul.f32 %v216, %v220
      %v229 = vmul.f32 %v217, %v220
      %v230 = vld [vmem:[%s2] sm:$0x1]
      %v232 = vperm.slane %v230, 0
      %v234 = vadd.f32 %v222, %v232
      %v235 = vadd.f32 %v223, %v232
      %v236 = vadd.f32 %v224, %v232
      %v237 = vadd.f32 %v225, %v232
      %v238 = vadd.f32 %v226, %v232
      %v239 = vadd.f32 %v227, %v232
      %v240 = vadd.f32 %v228, %v232
      %v241 = vadd.f32 %v229, %v232
      %vm242 = vcmp.gt.f32.partialorder %v234, 0.0
      %vm243 = vcmp.gt.f32.partialorder %v235, 0.0
      %vm244 = vcmp.gt.f32.partialorder %v236, 0.0
      %vm245 = vcmp.gt.f32.partialorder %v237, 0.0
      %vm246 = vcmp.gt.f32.partialorder %v238, 0.0
      %vm247 = vcmp.gt.f32.partialorder %v239, 0.0
      %vm248 = vcmp.gt.f32.partialorder %v240, 0.0
      %vm249 = vcmp.gt.f32.partialorder %v241, 0.0
      %v250 = vmul.f32 %v234, 0.2
      %v251 = vmul.f32 %v235, 0.2
      %v252 = vmul.f32 %v236, 0.2
      %v253 = vmul.f32 %v237, 0.2
      %v254 = vmul.f32 %v238, 0.2
      %v255 = vmul.f32 %v239, 0.2
      %v256 = vmul.f32 %v240, 0.2
      %v257 = vmul.f32 %v241, 0.2
      %v258 = vsel %vm242, %v234, %v250
      %v259 = vsel %vm243, %v235, %v251
      %v260 = vsel %vm244, %v236, %v252
      %v261 = vsel %vm245, %v237, %v253
      %v262 = vsel %vm246, %v238, %v254
      %v263 = vsel %vm247, %v239, %v255
      %v264 = vsel %vm248, %v240, %v256
      %v265 = vsel %vm249, %v241, %v257
      %vm266 = vcmask 64512
      %267 = vst.msk [vmem:[%s208] sm:$0xff] %vm266, %v258
      %268 = vst.msk [vmem:[%s208 + $0x8] sm:$0xff] %vm266, %v259
      %269 = vst.msk [vmem:[%s208 + $0x10] sm:$0xff] %vm266, %v260
      %270 = vst.msk [vmem:[%s208 + $0x18] sm:$0xff] %vm266, %v261
      %271 = vst.msk [vmem:[%s208 + $0x20] sm:$0xff] %vm266, %v262
      %272 = vst.msk [vmem:[%s208 + $0x28] sm:$0xff] %vm266, %v263
      %273 = vst.msk [vmem:[%s208 + $0x30] sm:$0xff] %vm266, %v264
      %274 = vst.msk [vmem:[%s208 + $0x38] sm:$0xff] %vm266, %v265
      %s275 = smul.u32 8, %s19
      %p276 = scmp.lt.s32.totalorder %s18, 1
      %s277 = scalar_select %p276, %s18, 1
      %p278 = scmp.lt.s32.totalorder %s275, 7
      %s279 = scalar_select %p278, %s275, 7
      %s280 = smul.addr %s277, 8
      %s281 = sadd.s32 %s279, %s280
      %s282 = smul.addr %s281, 8
      %s283 = scalar_lea.vmem %s3, %s282
      // Predicated region
      $region33: #{down_lpf_forward.7} parent=31 // pred_check
        %p284 = pneg %p116
      $region34: #{down_lpf_forward.7} parent=31 // pred_check_branch
        %286 = sbr.rel (%p284) target = $region36
      $region35: #{down_lpf_forward.7} parent=31 // pred_region
        %s287 = smul.u32 8, %s19
      $region36: #{down_lpf_forward.7} parent=31 // pred_fallthru
        _
    $region32: #{down_lpf_forward.7} parent=5 // pred_fallthru
      _
    %p288 = scmp.le.s32.totalorder 2, %s9
    // Predicated region
    $region37: #{down_lpf_forward.7} parent=5 // pred_check
      %p289 = pneg %p288
    $region38: #{down_lpf_forward.7} parent=5 // pred_check_branch
      %291 = sbr.rel (%p289) target = $region40
    $region39: #{down_lpf_forward.7} parent=5 // pred_region
      %s292 = ssub.s32 %s9, 2
      // Predicated region
      $region41: #{down_lpf_forward.7} parent=39 // pred_check
        %p293 = pneg %p122
      $region42: #{down_lpf_forward.7} parent=39 // pred_check_branch
        %295 = sbr.rel (%p293) target = $region44
      $region43: #{down_lpf_forward.7} parent=39 // pred_region
        %s296 = smul.u32 8, %s21
        %p297 = scmp.lt.s32.totalorder %s20, 1
        %s298 = scalar_select %p297, %s20, 1
        %p299 = scmp.lt.s32.totalorder %s296, 7
        %s300 = scalar_select %p299, %s296, 7
        %s301 = smul.addr %s298, 8
        %s302 = sadd.s32 %s300, %s301
        %s303 = smul.addr %s302, 8
        %s304 = scalar_lea.vmem %s3, %s303
      $region44: #{down_lpf_forward.7} parent=39 // pred_fallthru
        _
    $region40: #{down_lpf_forward.7} parent=5 // pred_fallthru
      _
  $region6: #{down_lpf_forward.7} parent=0 // loop_footer
    %s13 = sadd.s32 1, %s9
  $region7: #{down_lpf_forward.7} parent=0 // loop_footer_branch
    %8 = sbr.rel target = $region3
  $region8: #{down_lpf_forward.7} parent=0 // loop_exit
    _

// kernel: down_lpf_forward.6
$region0: #{down_lpf_forward.6}
  #allocation0 [shape = 'u32[]', space=smem, size = 0x4, offset = 0x4, fixed_abs, tag = 'smem constant byte address 0x4 - core index']
  #allocation1 [shape = 'u32[72,128]{1,0:T(1,128)}', space=vmem, size = 0x9000, scoped, tag = 'internal scratch']
  %s0 = inlined_call_operand.vmem [shape: f32[2,10,10,4], index: 0, kind: input, shape index: {}, may-alias: {0,1,2}]
  %s1 = inlined_call_operand.vmem [shape: f32[2,10,10,4], index: 1, kind: input, shape index: {}, may-alias: {0,1,2}]
  %s2 = inlined_call_operand.vmem [shape: f32[2,10,10,4], index: 2, kind: input, shape index: {}, may-alias: {0,1,2}]
  %s3 = inlined_call_operand.vmem [shape: f32[36,8], index: 3, kind: input, shape index: {}]
  %s4 = inlined_call_operand.vmem [shape: f32[1,8], index: 4, kind: input, shape index: {}]
  %s5 = inlined_call_operand.vmem [shape: f32[2,8,8,8], index: 5, kind: output, shape index: {0}]
  %s6 = inlined_call_operand.vmem [shape: f32[2,2,8], index: 6, kind: output, shape index: {1}]
  %7 = xla_tuple %s5, %s6
  %s8 = sld [smem:[#allocation0]]
  $region69: #{down_lpf_forward.6} parent=0
    _
  %s10 = ssub.s32 1, %s8
  %s11 = scalar_select 0, %s10, %s8
  loop: start=0, step=1, limit=4
  $region2: #{down_lpf_forward.6} parent=0 // loop_pre_header
    _
  $region3: #{down_lpf_forward.6} parent=0 // loop_header
    %s13 = sphi 0, %s17
    %p14 = scmp.ge.s32.totalorder %s13, 4
    %s20 = sphi 0, %s32
    %s21 = sphi 0, %s28
    %s22 = sphi 0, %s20
    %s23 = sphi 0, %s21
    %s24 = sphi 0, %s22
    %s25 = sphi 0, %s23
    %s37 = sphi 0, %s39
    %s40 = sphi 0, %s37
    %s41 = sphi 0, %s40
    %s57 = sphi 0, %s41
    %s69 = sphi 0, %s71
    %s72 = sphi 0, %s69
    %s73 = sphi 0, %s72
    %s89 = sphi 0, %s73
    %s103 = sphi 0, %s105
    %s106 = sphi 0, %s103
    %s107 = sphi 0, %s106
    %s123 = sphi 0, %s107
    %s127 = sphi 0, %s127
    %s129 = sphi 0, %s127
    %s130 = sphi 0, %s129
    %s144 = sphi 0, %s130
    %s148 = sphi 0, %s148
    %s150 = sphi 0, %s148
    %s151 = sphi 0, %s150
    %s165 = sphi 0, %s151
    %s173 = sphi 0, %s175
    %s176 = sphi 0, %s173
    %s177 = sphi 0, %s176
    %s193 = sphi 0, %s177
    %s199 = sphi 0, %s201
    %s202 = sphi 0, %s199
    %s203 = sphi 0, %s202
    %s219 = sphi 0, %s203
  $region4: #{down_lpf_forward.6} parent=0 // loop_header_branch
    %16 = sbr.rel (%p14) target = $region8
  $region5: #{down_lpf_forward.6} parent=0 // loop_body
    %s18 = ssub.s32 %s13, 1
    %s19 = ssub.s32 %s13, 2
    %s26 = sadd.s32 1, %s21
    %p27 = scmp.ge.s32.totalorder %s26, 1
    %s28 = scalar_select %p27, 0, %s26
    %s29 = sadd.s32 1, %s20
    %s30 = scalar_select %p27, %s29, %s20
    %p31 = scmp.ge.s32.totalorder %s30, 2
    %s32 = scalar_select %p31, 0, %s30
    %s33 = ssub.s32 %s20, %s32
    %s34 = ssub.s32 %s21, %s28
    %s35 = sor.u32 %s33, %s34
    %p36 = scmp.eq.s32.totalorder %s35, 0
    %s38 = sadd.s32 %s37, 1
    %s39 = scalar_select %p36, %s37, %s38
    %p42 = pneg %p36
    %p43 = scmp.eq.s32.totalorder %s13, 1
    %p44 = por %p42, %p43
    %p45 = scmp.ne.s32.totalorder %s37, %s40
    %p46 = scmp.eq.s32.totalorder %s13, 0
    %p47 = por %p45, %p46
    %p48 = scmp.ne.s32.totalorder %s37, %s40
    %p49 = scmp.eq.s32.totalorder %s18, 1
    %p50 = por %p48, %p49
    %p51 = scmp.ne.s32.totalorder %s40, %s41
    %p52 = scmp.eq.s32.totalorder %s18, 0
    %p53 = por %p51, %p52
    %p54 = scmp.ne.s32.totalorder %s40, %s41
    %p55 = scmp.eq.s32.totalorder %s19, 1
    %p56 = por %p54, %p55
    %p58 = scmp.ne.s32.totalorder %s41, %s57
    %p59 = scmp.eq.s32.totalorder %s19, 0
    %p60 = por %p58, %p59
    %s61 = sadd.s32 %s21, 1
    %s62 = smul.u32 %s61, 8
    %s63 = sadd.s32 %s28, 1
    %s64 = smul.u32 %s63, 8
    %s65 = ssub.s32 %s20, %s32
    %s66 = ssub.s32 %s62, %s64
    %s67 = sor.u32 %s65, %s66
    %p68 = scmp.eq.s32.totalorder %s67, 0
    %s70 = sadd.s32 %s69, 1
    %s71 = scalar_select %p68, %s69, %s70
    %p74 = pneg %p68
    %p75 = scmp.eq.s32.totalorder %s13, 1
    %p76 = por %p74, %p75
    %p77 = scmp.ne.s32.totalorder %s69, %s72
    %p78 = scmp.eq.s32.totalorder %s13, 0
    %p79 = por %p77, %p78
    %p80 = scmp.ne.s32.totalorder %s69, %s72
    %p81 = scmp.eq.s32.totalorder %s18, 1
    %p82 = por %p80, %p81
    %p83 = scmp.ne.s32.totalorder %s72, %s73
    %p84 = scmp.eq.s32.totalorder %s18, 0
    %p85 = por %p83, %p84
    %p86 = scmp.ne.s32.totalorder %s72, %s73
    %p87 = scmp.eq.s32.totalorder %s19, 1
    %p88 = por %p86, %p87
    %p90 = scmp.ne.s32.totalorder %s73, %s89
    %p91 = scmp.eq.s32.totalorder %s19, 0
    %p92 = por %p90, %p91
    %s93 = sadd.s32 %s21, 1
    %s94 = smul.u32 %s93, 8
    %s95 = sadd.s32 %s94, 1
    %s96 = sadd.s32 %s28, 1
    %s97 = smul.u32 %s96, 8
    %s98 = sadd.s32 %s97, 1
    %s99 = ssub.s32 %s20, %s32
    %s100 = ssub.s32 %s95, %s98
    %s101 = sor.u32 %s99, %s100
    %p102 = scmp.eq.s32.totalorder %s101, 0
    %s104 = sadd.s32 %s103, 1
    %s105 = scalar_select %p102, %s103, %s104
    %p108 = pneg %p102
    %p109 = scmp.eq.s32.totalorder %s13, 1
    %p110 = por %p108, %p109
    %p111 = scmp.ne.s32.totalorder %s103, %s106
    %p112 = scmp.eq.s32.totalorder %s13, 0
    %p113 = por %p111, %p112
    %p114 = scmp.ne.s32.totalorder %s103, %s106
    %p115 = scmp.eq.s32.totalorder %s18, 1
    %p116 = por %p114, %p115
    %p117 = scmp.ne.s32.totalorder %s106, %s107
    %p118 = scmp.eq.s32.totalorder %s18, 0
    %p119 = por %p117, %p118
    %p120 = scmp.ne.s32.totalorder %s106, %s107
    %p121 = scmp.eq.s32.totalorder %s19, 1
    %p122 = por %p120, %p121
    %p124 = scmp.ne.s32.totalorder %s107, %s123
    %p125 = scmp.eq.s32.totalorder %s19, 0
    %p126 = por %p124, %p125
    %s128 = sadd.s32 %s127, 1
    %p131 = scmp.eq.s32.totalorder %s13, 1
    %p132 = scmp.ne.s32.totalorder %s127, %s129
    %p133 = scmp.eq.s32.totalorder %s13, 0
    %p134 = por %p132, %p133
    %p135 = scmp.ne.s32.totalorder %s127, %s129
    %p136 = scmp.eq.s32.totalorder %s18, 1
    %p137 = por %p135, %p136
    %p138 = scmp.ne.s32.totalorder %s129, %s130
    %p139 = scmp.eq.s32.totalorder %s18, 0
    %p140 = por %p138, %p139
    %p141 = scmp.ne.s32.totalorder %s129, %s130
    %p142 = scmp.eq.s32.totalorder %s19, 1
    %p143 = por %p141, %p142
    %p145 = scmp.ne.s32.totalorder %s130, %s144
    %p146 = scmp.eq.s32.totalorder %s19, 0
    %p147 = por %p145, %p146
    %s149 = sadd.s32 %s148, 1
    %p152 = scmp.eq.s32.totalorder %s13, 1
    %p153 = scmp.ne.s32.totalorder %s148, %s150
    %p154 = scmp.eq.s32.totalorder %s13, 0
    %p155 = por %p153, %p154
    %p156 = scmp.ne.s32.totalorder %s148, %s150
    %p157 = scmp.eq.s32.totalorder %s18, 1
    %p158 = por %p156, %p157
    %p159 = scmp.ne.s32.totalorder %s150, %s151
    %p160 = scmp.eq.s32.totalorder %s18, 0
    %p161 = por %p159, %p160
    %p162 = scmp.ne.s32.totalorder %s150, %s151
    %p163 = scmp.eq.s32.totalorder %s19, 1
    %p164 = por %p162, %p163
    %p166 = scmp.ne.s32.totalorder %s151, %s165
    %p167 = scmp.eq.s32.totalorder %s19, 0
    %p168 = por %p166, %p167
    %s169 = ssub.s32 %s20, %s32
    %s170 = ssub.s32 %s21, %s28
    %s171 = sor.u32 %s169, %s170
    %p172 = scmp.eq.s32.totalorder %s171, 0
    %s174 = sadd.s32 %s173, 1
    %s175 = scalar_select %p172, %s173, %s174
    %p178 = pneg %p172
    %p179 = scmp.eq.s32.totalorder %s13, 1
    %p180 = por %p178, %p179
    %p181 = scmp.ne.s32.totalorder %s173, %s176
    %p182 = scmp.eq.s32.totalorder %s13, 0
    %p183 = por %p181, %p182
    %p184 = scmp.ne.s32.totalorder %s173, %s176
    %p185 = scmp.eq.s32.totalorder %s18, 1
    %p186 = por %p184, %p185
    %p187 = scmp.ne.s32.totalorder %s176, %s177
    %p188 = scmp.eq.s32.totalorder %s18, 0
    %p189 = por %p187, %p188
    %p190 = scmp.ne.s32.totalorder %s176, %s177
    %p191 = scmp.eq.s32.totalorder %s19, 1
    %p192 = por %p190, %p191
    %p194 = scmp.ne.s32.totalorder %s177, %s193
    %p195 = scmp.eq.s32.totalorder %s19, 0
    %p196 = por %p194, %p195
    %s197 = ssub.s32 %s20, %s32
    %p198 = scmp.eq.s32.totalorder %s197, 0
    %s200 = sadd.s32 %s199, 1
    %s201 = scalar_select %p198, %s199, %s200
    %p204 = pneg %p198
    %p205 = scmp.eq.s32.totalorder %s13, 1
    %p206 = por %p204, %p205
    %p207 = scmp.ne.s32.totalorder %s199, %s202
    %p208 = scmp.eq.s32.totalorder %s13, 0
    %p209 = por %p207, %p208
    %p210 = scmp.ne.s32.totalorder %s199, %s202
    %p211 = scmp.eq.s32.totalorder %s18, 1
    %p212 = por %p210, %p211
    %p213 = scmp.ne.s32.totalorder %s202, %s203
    %p214 = scmp.eq.s32.totalorder %s18, 0
    %p215 = por %p213, %p214
    %p216 = scmp.ne.s32.totalorder %s202, %s203
    %p217 = scmp.eq.s32.totalorder %s19, 1
    %p218 = por %p216, %p217
    %p220 = scmp.ne.s32.totalorder %s203, %s219
    %p221 = scmp.eq.s32.totalorder %s19, 0
    %p222 = por %p220, %p221
    %p223 = scmp.le.s32.totalorder 1, %s13
    %p224 = scmp.lt.s32.totalorder %s13, 3
    %p225 = pnand %p223, %p224
    %p226 = pneg %p225
    // Predicated region
    $region9: #{down_lpf_forward.6} parent=5 // pred_check
      _
    $region10: #{down_lpf_forward.6} parent=5 // pred_check_branch
      %228 = sbr.rel (%p225) target = $region12
    $region11: #{down_lpf_forward.6} parent=5 // pred_region
      %s229 = ssub.s32 %s13, 1
      // Predicated region
      $region13: #{down_lpf_forward.6} parent=11 // pred_check
        %p230 = pneg %p140
      $region14: #{down_lpf_forward.6} parent=11 // pred_check_branch
        %232 = sbr.rel (%p230) target = $region16
      $region15: #{down_lpf_forward.6} parent=11 // pred_region
        _
      $region16: #{down_lpf_forward.6} parent=11 // pred_fallthru
        _
      // Predicated region
      $region17: #{down_lpf_forward.6} parent=11 // pred_check
        %p233 = pneg %p161
      $region18: #{down_lpf_forward.6} parent=11 // pred_check_branch
        %235 = sbr.rel (%p233) target = $region20
      $region19: #{down_lpf_forward.6} parent=11 // pred_region
        _
      $region20: #{down_lpf_forward.6} parent=11 // pred_fallthru
        _
    $region12: #{down_lpf_forward.6} parent=5 // pred_fallthru
      _
    %p236 = scmp.lt.s32.totalorder %s13, 2
    // Predicated region
    $region21: #{down_lpf_forward.6} parent=5 // pred_check
      %p237 = pneg %p236
    $region22: #{down_lpf_forward.6} parent=5 // pred_check_branch
      %239 = sbr.rel (%p237) target = $region24
    $region23: #{down_lpf_forward.6} parent=5 // pred_region
      // Predicated region
      $region25: #{down_lpf_forward.6} parent=23 // pred_check
        %p240 = pneg %p47
      $region26: #{down_lpf_forward.6} parent=23 // pred_check_branch
        %242 = sbr.rel (%p240) target = $region28
      $region27: #{down_lpf_forward.6} parent=23 // pred_region
        %s243 = smul.u32 8, %s21
        %s244 = ssub.s32 10, %s243
        %p245 = scmp.lt.s32.totalorder %s244, 8
        %s246 = scalar_select %p245, %s244, 8
        %s247 = smul.u32 8, %s246
        %s248 = smul.u32 %s247, 2
        %p249 = scmp.lt.s32.totalorder %s20, 1
        %s250 = scalar_select %p249, %s20, 1
        %p251 = scmp.lt.s32.totalorder %s243, 9
        %s252 = scalar_select %p251, %s243, 9
        %s253 = smul.addr %s252, 2
        %s254 = smul.addr %s250, 20
        %s255 = sadd.s32 %s253, %s254
        %s256 = smul.addr %s255, 8
        %s257 = scalar_lea.vmem %s0, %s256
        %s258 = smul.u32 8, %s21
        %s259 = ssub.s32 10, %s258
        %p260 = scmp.lt.s32.totalorder %s259, 8
        %s261 = scalar_select %p260, %s259, 8
        %s262 = smul.u32 8, %s261
        %s263 = smul.u32 %s262, 2
      $region28: #{down_lpf_forward.6} parent=23 // pred_fallthru
        _
      // Predicated region
      $region29: #{down_lpf_forward.6} parent=23 // pred_check
        %p264 = pneg %p79
      $region30: #{down_lpf_forward.6} parent=23 // pred_check_branch
        %266 = sbr.rel (%p264) target = $region32
      $region31: #{down_lpf_forward.6} parent=23 // pred_region
        %s267 = sadd.s32 %s21, 1
        %s268 = smul.u32 %s267, 8
        %p269 = scmp.lt.s32.totalorder %s20, 1
        %s270 = scalar_select %p269, %s20, 1
        %p271 = scmp.lt.s32.totalorder %s268, 9
        %s272 = scalar_select %p271, %s268, 9
        %s273 = smul.addr %s272, 2
        %s274 = smul.addr %s270, 20
        %s275 = sadd.s32 %s273, %s274
        %s276 = smul.addr %s275, 8
        %s277 = scalar_lea.vmem %s1, %s276
        %s278 = sadd.s32 %s21, 1
        %s279 = smul.u32 %s278, 8
      $region32: #{down_lpf_forward.6} parent=23 // pred_fallthru
        _
      // Predicated region
      $region33: #{down_lpf_forward.6} parent=23 // pred_check
        %p280 = pneg %p113
      $region34: #{down_lpf_forward.6} parent=23 // pred_check_branch
        %282 = sbr.rel (%p280) target = $region36
      $region35: #{down_lpf_forward.6} parent=23 // pred_region
        %s283 = sadd.s32 %s21, 1
        %s284 = smul.u32 %s283, 8
        %s285 = sadd.s32 %s284, 1
        %p286 = scmp.lt.s32.totalorder %s20, 1
        %s287 = scalar_select %p286, %s20, 1
        %p288 = scmp.lt.s32.totalorder %s285, 9
        %s289 = scalar_select %p288, %s285, 9
        %s290 = smul.addr %s289, 2
        %s291 = smul.addr %s287, 20
        %s292 = sadd.s32 %s290, %s291
        %s293 = smul.addr %s292, 8
        %s294 = scalar_lea.vmem %s2, %s293
        %s295 = sadd.s32 %s21, 1
        %s296 = smul.u32 %s295, 8
        %s297 = sadd.s32 %s296, 1
      $region36: #{down_lpf_forward.6} parent=23 // pred_fallthru
        _
    $region24: #{down_lpf_forward.6} parent=5 // pred_fallthru
      _
    %p298 = scmp.le.s32.totalorder 1, %s13
    %p299 = scmp.lt.s32.totalorder %s13, 3
    %p300 = pnand %p298, %p299
    %p301 = pneg %p300
    // Predicated region
    $region37: #{down_lpf_forward.6} parent=5 // pred_check
      _
    $region38: #{down_lpf_forward.6} parent=5 // pred_check_branch
      %303 = sbr.rel (%p300) target = $region40
    $region39: #{down_lpf_forward.6} parent=5 // pred_region
      %s304 = ssub.s32 %s13, 1
      %s305 = smul.u32 8, %s23
      %s306 = ssub.s32 10, %s305
      %p307 = scmp.lt.s32.totalorder %s306, 8
      %s308 = scalar_select %p307, %s306, 8
      %s309 = smul.u32 8, %s308
      %s310 = smul.u32 %s309, 2
      %p311 = scmp.lt.s32.totalorder %s22, 1
      %s312 = scalar_select %p311, %s22, 1
      %p313 = scmp.lt.s32.totalorder %s305, 9
      %s314 = scalar_select %p313, %s305, 9
      %s315 = smul.addr %s314, 2
      %s316 = smul.addr %s312, 20
      %s317 = sadd.s32 %s315, %s316
      %s318 = smul.addr %s317, 8
      %s319 = scalar_lea.vmem %s0, %s318
      %p320 = pneg %p53
      %p321 = pneg %p50
      %s322 = sadd.s32 %s23, 1
      %s323 = smul.u32 %s322, 8
      %p324 = scmp.lt.s32.totalorder %s22, 1
      %s325 = scalar_select %p324, %s22, 1
      %p326 = scmp.lt.s32.totalorder %s323, 9
      %s327 = scalar_select %p326, %s323, 9
      %s328 = smul.addr %s327, 2
      %s329 = smul.addr %s325, 20
      %s330 = sadd.s32 %s328, %s329
      %s331 = smul.addr %s330, 8
      %s332 = scalar_lea.vmem %s1, %s331
      %p333 = pneg %p85
      %p334 = pneg %p82
      %s335 = sadd.s32 %s23, 1
      %s336 = smul.u32 %s335, 8
      %s337 = sadd.s32 %s336, 1
      %p338 = scmp.lt.s32.totalorder %s22, 1
      %s339 = scalar_select %p338, %s22, 1
      %p340 = scmp.lt.s32.totalorder %s337, 9
      %s341 = scalar_select %p340, %s337, 9
      %s342 = smul.addr %s341, 2
      %s343 = smul.addr %s339, 20
      %s344 = sadd.s32 %s342, %s343
      %s345 = smul.addr %s344, 8
      %s346 = scalar_lea.vmem %s2, %s345
      %p347 = pneg %p119
      %p348 = pneg %p116
      %p349 = pneg %p140
      %p350 = pneg %p137
      %p351 = pneg %p161
      %p352 = pneg %p158
      %p353 = pneg %p189
      %p354 = pneg %p186
      %s355 = smul.u32 8, %s23
      %p356 = scmp.lt.s32.totalorder %s22, 1
      %s357 = scalar_select %p356, %s22, 1
      %p358 = scmp.lt.s32.totalorder %s355, 7
      %s359 = scalar_select %p358, %s355, 7
      %s360 = smul.addr %s357, 8
      %s361 = sadd.s32 %s359, %s360
      %s362 = smul.addr %s361, 8
      %s363 = scalar_lea.vmem %s5, %s362
      %p364 = pneg %p215
      %p365 = pneg %p212
      %p366 = scmp.lt.s32.totalorder %s22, 1
      %s367 = scalar_select %p366, %s22, 1
      %s368 = smul.addr %s367, 2
      %s369 = scalar_lea.vmem %s6, %s368
      %s370 = smul.u32 8, %s23
      %s371 = ssub.s32 10, %s370
      %p372 = scmp.lt.s32.totalorder %s371, 8
      %s373 = scalar_select %p372, %s371, 8
      %s374 = smul.u32 8, %s373
      %s375 = smul.u32 %s374, 2
      %p376 = scmp.lt.s32.totalorder %s22, 1
      %s377 = scalar_select %p376, %s22, 1
      %p378 = scmp.lt.s32.totalorder %s370, 9
      %s379 = scalar_select %p378, %s370, 9
      %s380 = smul.addr %s379, 2
      %s381 = smul.addr %s377, 20
      %s382 = sadd.s32 %s380, %s381
      %s383 = smul.addr %s382, 8
      %s384 = scalar_lea.vmem %s0, %s383
      %s385 = smul.u32 8, %s23
      %s386 = ssub.s32 10, %s385
      %p387 = scmp.lt.s32.totalorder %s386, 8
      %s388 = scalar_select %p387, %s386, 8
      %s389 = smul.u32 8, %s388
      %s390 = smul.u32 %s389, 2
      %s391 = sadd.s32 %s23, 1
      %s392 = smul.u32 %s391, 8
      %p393 = scmp.lt.s32.totalorder %s22, 1
      %s394 = scalar_select %p393, %s22, 1
      %p395 = scmp.lt.s32.totalorder %s392, 9
      %s396 = scalar_select %p395, %s392, 9
      %s397 = smul.addr %s396, 2
      %s398 = smul.addr %s394, 20
      %s399 = sadd.s32 %s397, %s398
      %s400 = smul.addr %s399, 8
      %s401 = scalar_lea.vmem %s1, %s400
      %s402 = sadd.s32 %s23, 1
      %s403 = smul.u32 %s402, 8
      %s404 = sadd.s32 %s23, 1
      %s405 = smul.u32 %s404, 8
      %s406 = sadd.s32 %s405, 1
      %p407 = scmp.lt.s32.totalorder %s22, 1
      %s408 = scalar_select %p407, %s22, 1
      %p409 = scmp.lt.s32.totalorder %s406, 9
      %s410 = scalar_select %p409, %s406, 9
      %s411 = smul.addr %s410, 2
      %s412 = smul.addr %s408, 20
      %s413 = sadd.s32 %s411, %s412
      %s414 = smul.addr %s413, 8
      %s415 = scalar_lea.vmem %s2, %s414
      %s416 = sadd.s32 %s23, 1
      %s417 = smul.u32 %s416, 8
      %s418 = sadd.s32 %s417, 1
      %s419 = smul.u32 8, %s23
      %p420 = scmp.lt.s32.totalorder %s22, 1
      %s421 = scalar_select %p420, %s22, 1
      %p422 = scmp.lt.s32.totalorder %s419, 7
      %s423 = scalar_select %p422, %s419, 7
      %s424 = smul.addr %s421, 8
      %s425 = sadd.s32 %s423, %s424
      %s426 = smul.addr %s425, 8
      %s427 = scalar_lea.vmem %s5, %s426
      %s428 = smul.u32 8, %s23
      %p429 = scmp.lt.s32.totalorder %s22, 1
      %s430 = scalar_select %p429, %s22, 1
      %s431 = smul.addr %s430, 2
      %s432 = scalar_lea.vmem %s6, %s431
      %v433 = vld [vmem:[%s384] sm:$0xff]
      %v434 = vld [vmem:[%s384 + $0x8] sm:$0x3]
      %v435 = vld [vmem:[%s384 + $0x10] sm:$0xff]
      %v436 = vld [vmem:[%s384 + $0x18] sm:$0x3]
      %v437 = vld [vmem:[%s384 + $0x20] sm:$0xff]
      %v438 = vld [vmem:[%s384 + $0x28] sm:$0x3]
      %v439 = vld [vmem:[%s384 + $0x30] sm:$0xff]
      %v440 = vld [vmem:[%s384 + $0x38] sm:$0x3]
      %v441 = vld [vmem:[%s384 + $0x40] sm:$0xff]
      %v442 = vld [vmem:[%s384 + $0x48] sm:$0x3]
      %v443 = vld [vmem:[%s384 + $0x50] sm:$0xff]
      %v444 = vld [vmem:[%s384 + $0x58] sm:$0x3]
      %v445 = vld [vmem:[%s384 + $0x60] sm:$0xff]
      %v446 = vld [vmem:[%s384 + $0x68] sm:$0x3]
      %v447 = vld [vmem:[%s384 + $0x70] sm:$0xff]
      %v448 = vld [vmem:[%s384 + $0x78] sm:$0x3]
      %v449 = vld [vmem:[%s401] sm:$0xff]
      %v450 = vld [vmem:[%s401 + $0x8] sm:$0x3]
      %v451 = vld [vmem:[%s415] sm:$0xff]
      %v452 = vld [vmem:[%s415 + $0x8] sm:$0x3]
      %vm469 = vcmask 1046528
      %v470 = vrot.slane %v433, 1
      %v471 = vrot.slane %v434, 1
      %v472 = vsel %vm469, %v470, %v471
      %v473 = vrot.slane %v435, 1
      %v474 = vrot.slane %v436, 1
      %v475 = vsel %vm469, %v473, %v474
      %v476 = vrot.slane %v437, 1
      %v477 = vrot.slane %v438, 1
      %v478 = vsel %vm469, %v476, %v477
      %v479 = vrot.slane %v439, 1
      %v480 = vrot.slane %v440, 1
      %v481 = vsel %vm469, %v479, %v480
      %v482 = vrot.slane %v441, 1
      %v483 = vrot.slane %v442, 1
      %v484 = vsel %vm469, %v482, %v483
      %v485 = vrot.slane %v443, 1
      %v486 = vrot.slane %v444, 1
      %v487 = vsel %vm469, %v485, %v486
      %v488 = vrot.slane %v445, 1
      %v489 = vrot.slane %v446, 1
      %v490 = vsel %vm469, %v488, %v489
      %v491 = vrot.slane %v447, 1
      %v492 = vrot.slane %v448, 1
      %v493 = vsel %vm469, %v491, %v492
      %vm494 = vcmask 1045504
      %v495 = vrot.slane %v433, 2
      %v496 = vrot.slane %v434, 2
      %v497 = vsel %vm494, %v495, %v496
      %v498 = vrot.slane %v435, 2
      %v499 = vrot.slane %v436, 2
      %v500 = vsel %vm494, %v498, %v499
      %v501 = vrot.slane %v437, 2
      %v502 = vrot.slane %v438, 2
      %v503 = vsel %vm494, %v501, %v502
      %v504 = vrot.slane %v439, 2
      %v505 = vrot.slane %v440, 2
      %v506 = vsel %vm494, %v504, %v505
      %v507 = vrot.slane %v441, 2
      %v508 = vrot.slane %v442, 2
      %v509 = vsel %vm494, %v507, %v508
      %v510 = vrot.slane %v443, 2
      %v511 = vrot.slane %v444, 2
      %v512 = vsel %vm494, %v510, %v511
      %v513 = vrot.slane %v445, 2
      %v514 = vrot.slane %v446, 2
      %v515 = vsel %vm494, %v513, %v514
      %v516 = vrot.slane %v447, 2
      %v517 = vrot.slane %v448, 2
      %v518 = vsel %vm494, %v516, %v517
      %v521 = vrot.slane %v449, 1
      %v522 = vrot.slane %v450, 1
      %v523 = vsel %vm469, %v521, %v522
      %v524 = vrot.slane %v449, 2
      %v525 = vrot.slane %v450, 2
      %v526 = vsel %vm494, %v524, %v525
      %v529 = vrot.slane %v451, 1
      %v530 = vrot.slane %v452, 1
      %v531 = vsel %vm469, %v529, %v530
      %v532 = vrot.slane %v451, 2
      %v533 = vrot.slane %v452, 2
      %v534 = vsel %vm494, %v532, %v533
      %535 = vrot.lane.b32.xlu0 %v472, 4
      %v536 = vpop.permute.xlu0 %535
      %537 = vrot.lane.b32.xlu0 %v475, 4
      %v538 = vpop.permute.xlu0 %537
      %539 = vrot.lane.b32.xlu0 %v478, 4
      %v540 = vpop.permute.xlu0 %539
      %541 = vrot.lane.b32.xlu0 %v481, 4
      %v542 = vpop.permute.xlu0 %541
      %543 = vrot.lane.b32.xlu0 %v484, 4
      %v544 = vpop.permute.xlu0 %543
      %545 = vrot.lane.b32.xlu0 %v487, 4
      %v546 = vpop.permute.xlu0 %545
      %547 = vrot.lane.b32.xlu0 %v490, 4
      %v548 = vpop.permute.xlu0 %547
      %549 = vrot.lane.b32.xlu0 %v493, 4
      %v550 = vpop.permute.xlu0 %549
      %559 = vrot.lane.b32.xlu0 %v497, 8
      %v560 = vpop.permute.xlu0 %559
      %561 = vrot.lane.b32.xlu0 %v500, 8
      %v562 = vpop.permute.xlu0 %561
      %563 = vrot.lane.b32.xlu0 %v503, 8
      %v564 = vpop.permute.xlu0 %563
      %565 = vrot.lane.b32.xlu0 %v506, 8
      %v566 = vpop.permute.xlu0 %565
      %567 = vrot.lane.b32.xlu0 %v509, 8
      %v568 = vpop.permute.xlu0 %567
      %569 = vrot.lane.b32.xlu0 %v512, 8
      %v570 = vpop.permute.xlu0 %569
      %571 = vrot.lane.b32.xlu0 %v515, 8
      %v572 = vpop.permute.xlu0 %571
      %573 = vrot.lane.b32.xlu0 %v518, 8
      %v574 = vpop.permute.xlu0 %573
      %583 = vrot.lane.b32.xlu0 %v435, 12
      %v584 = vpop.permute.xlu0 %583
      %585 = vrot.lane.b32.xlu0 %v437, 12
      %v586 = vpop.permute.xlu0 %585
      %587 = vrot.lane.b32.xlu0 %v439, 12
      %v588 = vpop.permute.xlu0 %587
      %589 = vrot.lane.b32.xlu0 %v441, 12
      %v590 = vpop.permute.xlu0 %589
      %591 = vrot.lane.b32.xlu0 %v443, 12
      %v592 = vpop.permute.xlu0 %591
      %593 = vrot.lane.b32.xlu0 %v445, 12
      %v594 = vpop.permute.xlu0 %593
      %595 = vrot.lane.b32.xlu0 %v447, 12
      %v596 = vpop.permute.xlu0 %595
      %597 = vrot.lane.b32.xlu0 %v449, 12
      %v598 = vpop.permute.xlu0 %597
      %607 = vrot.lane.b32.xlu0 %v475, 16
      %v608 = vpop.permute.xlu0 %607
      %609 = vrot.lane.b32.xlu0 %v478, 16
      %v610 = vpop.permute.xlu0 %609
      %611 = vrot.lane.b32.xlu0 %v481, 16
      %v612 = vpop.permute.xlu0 %611
      %613 = vrot.lane.b32.xlu0 %v484, 16
      %v614 = vpop.permute.xlu0 %613
      %615 = vrot.lane.b32.xlu0 %v487, 16
      %v616 = vpop.permute.xlu0 %615
      %617 = vrot.lane.b32.xlu0 %v490, 16
      %v618 = vpop.permute.xlu0 %617
      %619 = vrot.lane.b32.xlu0 %v493, 16
      %v620 = vpop.permute.xlu0 %619
      %621 = vrot.lane.b32.xlu0 %v523, 16
      %v622 = vpop.permute.xlu0 %621
      %631 = vrot.lane.b32.xlu0 %v500, 20
      %v632 = vpop.permute.xlu0 %631
      %633 = vrot.lane.b32.xlu0 %v503, 20
      %v634 = vpop.permute.xlu0 %633
      %635 = vrot.lane.b32.xlu0 %v506, 20
      %v636 = vpop.permute.xlu0 %635
      %637 = vrot.lane.b32.xlu0 %v509, 20
      %v638 = vpop.permute.xlu0 %637
      %639 = vrot.lane.b32.xlu0 %v512, 20
      %v640 = vpop.permute.xlu0 %639
      %641 = vrot.lane.b32.xlu0 %v515, 20
      %v642 = vpop.permute.xlu0 %641
      %643 = vrot.lane.b32.xlu0 %v518, 20
      %v644 = vpop.permute.xlu0 %643
      %645 = vrot.lane.b32.xlu0 %v526, 20
      %v646 = vpop.permute.xlu0 %645
      %655 = vrot.lane.b32.xlu0 %v437, 24
      %v656 = vpop.permute.xlu0 %655
      %657 = vrot.lane.b32.xlu0 %v439, 24
      %v658 = vpop.permute.xlu0 %657
      %659 = vrot.lane.b32.xlu0 %v441, 24
      %v660 = vpop.permute.xlu0 %659
      %661 = vrot.lane.b32.xlu0 %v443, 24
      %v662 = vpop.permute.xlu0 %661
      %663 = vrot.lane.b32.xlu0 %v445, 24
      %v664 = vpop.permute.xlu0 %663
      %665 = vrot.lane.b32.xlu0 %v447, 24
      %v666 = vpop.permute.xlu0 %665
      %667 = vrot.lane.b32.xlu0 %v449, 24
      %v668 = vpop.permute.xlu0 %667
      %669 = vrot.lane.b32.xlu0 %v451, 24
      %v670 = vpop.permute.xlu0 %669
      %679 = vrot.lane.b32.xlu0 %v478, 28
      %v680 = vpop.permute.xlu0 %679
      %681 = vrot.lane.b32.xlu0 %v481, 28
      %v682 = vpop.permute.xlu0 %681
      %683 = vrot.lane.b32.xlu0 %v484, 28
      %v684 = vpop.permute.xlu0 %683
      %685 = vrot.lane.b32.xlu0 %v487, 28
      %v686 = vpop.permute.xlu0 %685
      %687 = vrot.lane.b32.xlu0 %v490, 28
      %v688 = vpop.permute.xlu0 %687
      %689 = vrot.lane.b32.xlu0 %v493, 28
      %v690 = vpop.permute.xlu0 %689
      %691 = vrot.lane.b32.xlu0 %v523, 28
      %v692 = vpop.permute.xlu0 %691
      %693 = vrot.lane.b32.xlu0 %v531, 28
      %v694 = vpop.permute.xlu0 %693
      %703 = vrot.lane.b32.xlu0 %v503, 32
      %v704 = vpop.permute.xlu0 %703
      %705 = vrot.lane.b32.xlu0 %v506, 32
      %v706 = vpop.permute.xlu0 %705
      %707 = vrot.lane.b32.xlu0 %v509, 32
      %v708 = vpop.permute.xlu0 %707
      %709 = vrot.lane.b32.xlu0 %v512, 32
      %v710 = vpop.permute.xlu0 %709
      %711 = vrot.lane.b32.xlu0 %v515, 32
      %v712 = vpop.permute.xlu0 %711
      %713 = vrot.lane.b32.xlu0 %v518, 32
      %v714 = vpop.permute.xlu0 %713
      %715 = vrot.lane.b32.xlu0 %v526, 32
      %v716 = vpop.permute.xlu0 %715
      %717 = vrot.lane.b32.xlu0 %v534, 32
      %v718 = vpop.permute.xlu0 %717
      %vm727 = vcmask 31744
      %v728 = vsel %vm727, %v433, %v536
      %v729 = vsel %vm727, %v435, %v538
      %v730 = vsel %vm727, %v437, %v540
      %v731 = vsel %vm727, %v439, %v542
      %v732 = vsel %vm727, %v441, %v544
      %v733 = vsel %vm727, %v443, %v546
      %v734 = vsel %vm727, %v445, %v548
      %v735 = vsel %vm727, %v447, %v550
      %vm736 = vcmask 64512
      %v737 = vsel %vm736, %v728, %v560
      %v738 = vsel %vm736, %v729, %v562
      %v739 = vsel %vm736, %v730, %v564
      %v740 = vsel %vm736, %v731, %v566
      %v741 = vsel %vm736, %v732, %v568
      %v742 = vsel %vm736, %v733, %v570
      %v743 = vsel %vm736, %v734, %v572
      %v744 = vsel %vm736, %v735, %v574
      %vm745 = vcmask 97280
      %v746 = vsel %vm745, %v737, %v584
      %v747 = vsel %vm745, %v738, %v586
      %v748 = vsel %vm745, %v739, %v588
      %v749 = vsel %vm745, %v740, %v590
      %v750 = vsel %vm745, %v741, %v592
      %v751 = vsel %vm745, %v742, %v594
      %v752 = vsel %vm745, %v743, %v596
      %v753 = vsel %vm745, %v744, %v598
      %vm754 = vcmask 130048
      %v755 = vsel %vm754, %v746, %v608
      %v756 = vsel %vm754, %v747, %v610
      %v757 = vsel %vm754, %v748, %v612
      %v758 = vsel %vm754, %v749, %v614
      %v759 = vsel %vm754, %v750, %v616
      %v760 = vsel %vm754, %v751, %v618
      %v761 = vsel %vm754, %v752, %v620
      %v762 = vsel %vm754, %v753, %v622
      %vm763 = vcmask 162816
      %v764 = vsel %vm763, %v755, %v632
      %v765 = vsel %vm763, %v756, %v634
      %v766 = vsel %vm763, %v757, %v636
      %v767 = vsel %vm763, %v758, %v638
      %v768 = vsel %vm763, %v759, %v640
      %v769 = vsel %vm763, %v760, %v642
      %v770 = vsel %vm763, %v761, %v644
      %v771 = vsel %vm763, %v762, %v646
      %vm772 = vcmask 195584
      %v773 = vsel %vm772, %v764, %v656
      %v774 = vsel %vm772, %v765, %v658
      %v775 = vsel %vm772, %v766, %v660
      %v776 = vsel %vm772, %v767, %v662
      %v777 = vsel %vm772, %v768, %v664
      %v778 = vsel %vm772, %v769, %v666
      %v779 = vsel %vm772, %v770, %v668
      %v780 = vsel %vm772, %v771, %v670
      %vm781 = vcmask 228352
      %v782 = vsel %vm781, %v773, %v680
      %v783 = vsel %vm781, %v774, %v682
      %v784 = vsel %vm781, %v775, %v684
      %v785 = vsel %vm781, %v776, %v686
      %v786 = vsel %vm781, %v777, %v688
      %v787 = vsel %vm781, %v778, %v690
      %v788 = vsel %vm781, %v779, %v692
      %v789 = vsel %vm781, %v780, %v694
      %vm790 = vcmask 261120
      %v791 = vsel %vm790, %v782, %v704
      %v792 = vsel %vm790, %v783, %v706
      %v793 = vsel %vm790, %v784, %v708
      %v794 = vsel %vm790, %v785, %v710
      %v795 = vsel %vm790, %v786, %v712
      %v796 = vsel %vm790, %v787, %v714
      %v797 = vsel %vm790, %v788, %v716
      %v798 = vsel %vm790, %v789, %v718
      %v799 = vld [vmem:[%s3] sm:$0xff]
      %v800 = vld [vmem:[%s3 + $0x8] sm:$0xff]
      %v801 = vld [vmem:[%s3 + $0x10] sm:$0xff]
      %v802 = vld [vmem:[%s3 + $0x18] sm:$0xff]
      %v803 = vld [vmem:[%s3 + $0x20] sm:$0xf]
      %v804 = vld [vmem:[%s4] sm:$0x1]
      %v806 = vperm.slane %v804, 0
      %vm808 = vcmask 293888
      %v810 = vsel %vm808, %v791, 0
      %v813 = vsel %vm808, %v792, 0
      %v816 = vsel %vm808, %v793, 0
      %v819 = vsel %vm808, %v794, 0
      %v822 = vsel %vm808, %v795, 0
      %v825 = vsel %vm808, %v796, 0
      %v828 = vsel %vm808, %v797, 0
      %v831 = vsel %vm808, %v798, 0
      %vm833 = vcmask 1043456
      %v835 = vsel %vm833, %v803, 0
      %837 = vmatpush.msra.mxu0 0.0
      %838 = vmatpush.msra.mxu0 0.0
      %839 = vmatpush.msra.mxu0 0.0
      %840 = vmatpush.msra.mxu0 0.0
      %841 = vmatpush.msra.mxu0 0.0
      %842 = vmatpush.msra.mxu0 0.0
      %843 = vmatpush.msra.mxu0 0.0
      %844 = vmatpush.msra.mxu0 0.0
      %845 = vmatpush.msra.mxu0 0.0
      %846 = vmatpush.msra.mxu0 0.0
      %847 = vmatpush.msra.mxu0 0.0
      %848 = vmatpush.msra.mxu0 %v835
      %849 = vmatpush.msra.mxu0 %v802
      %850 = vmatpush.msra.mxu0 %v801
      %851 = vmatpush.msra.mxu0 %v800
      %852 = vmatpush.msra.mxu0 %v799
      %853 = vmatmul.f32.gmra.mxu0 %v810
      %v854 = vpop.f32.mrf.mxu0
      %v855 = vadd.f32 %v806, %v854
      %856 = vmatmul.f32.gmra.mxu0 %v813
      %v857 = vpop.f32.mrf.mxu0
      %v858 = vadd.f32 %v806, %v857
      %859 = vmatmul.f32.gmra.mxu0 %v816
      %v860 = vpop.f32.mrf.mxu0
      %v861 = vadd.f32 %v806, %v860
      %862 = vmatmul.f32.gmra.mxu0 %v819
      %v863 = vpop.f32.mrf.mxu0
      %v864 = vadd.f32 %v806, %v863
      %865 = vmatmul.f32.gmra.mxu0 %v822
      %v866 = vpop.f32.mrf.mxu0
      %v867 = vadd.f32 %v806, %v866
      %868 = vmatmul.f32.gmra.mxu0 %v825
      %v869 = vpop.f32.mrf.mxu0
      %v870 = vadd.f32 %v806, %v869
      %871 = vmatmul.f32.gmra.mxu0 %v828
      %v872 = vpop.f32.mrf.mxu0
      %v873 = vadd.f32 %v806, %v872
      %874 = vmatmul.f32.gmra.mxu0 %v831
      %v875 = vpop.f32.mrf.mxu0
      %v876 = vadd.f32 %v806, %v875
      %877 = vdwg.mxu0
      %878 = vst.msk [vmem:[%s427] sm:$0xff] %vm736, %v855
      %879 = vst.msk [vmem:[%s427 + $0x8] sm:$0xff] %vm736, %v858
      %880 = vst.msk [vmem:[%s427 + $0x10] sm:$0xff] %vm736, %v861
      %881 = vst.msk [vmem:[%s427 + $0x18] sm:$0xff] %vm736, %v864
      %882 = vst.msk [vmem:[%s427 + $0x20] sm:$0xff] %vm736, %v867
      %883 = vst.msk [vmem:[%s427 + $0x28] sm:$0xff] %vm736, %v870
      %884 = vst.msk [vmem:[%s427 + $0x30] sm:$0xff] %vm736, %v873
      %885 = vst.msk [vmem:[%s427 + $0x38] sm:$0xff] %vm736, %v876
      %v886 = vsel %vm736, %v855, 0.0
      %v887 = vsel %vm736, %v858, 0.0
      %v888 = vadd.f32 %v886, %v887
      %v889 = vsel %vm736, %v861, 0.0
      %v890 = vadd.f32 %v888, %v889
      %v891 = vsel %vm736, %v864, 0.0
      %v892 = vadd.f32 %v890, %v891
      %v893 = vsel %vm736, %v867, 0.0
      %v894 = vadd.f32 %v892, %v893
      %v895 = vsel %vm736, %v870, 0.0
      %v896 = vadd.f32 %v894, %v895
      %v897 = vsel %vm736, %v873, 0.0
      %v898 = vadd.f32 %v896, %v897
      %v899 = vsel %vm736, %v876, 0.0
      %v900 = vadd.f32 %v898, %v899
      %v901 = vrot.slane %v900, 4
      %v902 = vadd.f32 %v900, %v901
      %v903 = vrot.slane %v902, 2
      %v904 = vadd.f32 %v902, %v903
      %v905 = vrot.slane %v904, 1
      %v906 = vadd.f32 %v904, %v905
      %v907 = vmul.f32 %v855, %v855
      %v908 = vmul.f32 %v858, %v858
      %v909 = vmul.f32 %v861, %v861
      %v910 = vmul.f32 %v864, %v864
      %v911 = vmul.f32 %v867, %v867
      %v912 = vmul.f32 %v870, %v870
      %v913 = vmul.f32 %v873, %v873
      %v914 = vmul.f32 %v876, %v876
      %v915 = vsel %vm736, %v907, 0.0
      %v916 = vsel %vm736, %v908, 0.0
      %v917 = vadd.f32 %v915, %v916
      %v918 = vsel %vm736, %v909, 0.0
      %v919 = vadd.f32 %v917, %v918
      %v920 = vsel %vm736, %v910, 0.0
      %v921 = vadd.f32 %v919, %v920
      %v922 = vsel %vm736, %v911, 0.0
      %v923 = vadd.f32 %v921, %v922
      %v924 = vsel %vm736, %v912, 0.0
      %v925 = vadd.f32 %v923, %v924
      %v926 = vsel %vm736, %v913, 0.0
      %v927 = vadd.f32 %v925, %v926
      %v928 = vsel %vm736, %v914, 0.0
      %v929 = vadd.f32 %v927, %v928
      %v930 = vrot.slane %v929, 4
      %v931 = vadd.f32 %v929, %v930
      %v932 = vrot.slane %v931, 2
      %v933 = vadd.f32 %v931, %v932
      %v934 = vrot.slane %v933, 1
      %v935 = vadd.f32 %v933, %v934
      %vm936 = vcmask 1040384
      %v937 = vsel %vm936, %v906, %v935
      %p938 = scmp.eq.s32.totalorder %s23, 0
      // Predicated region
      $region41: #{down_lpf_forward.6} parent=39 // pred_check
        %p939 = pneg %p938
      $region42: #{down_lpf_forward.6} parent=39 // pred_check_branch
        %941 = sbr.rel (%p939) target = $region44
      $region43: #{down_lpf_forward.6} parent=39 // pred_region
        %vm942 = vcmask 58368
        %943 = vst.msk [vmem:[%s432] sm:$0x3] %vm942, %v937
      $region44: #{down_lpf_forward.6} parent=39 // pred_fallthru
        _
      %p944 = scmp.ne.s32.totalorder %s23, 0
      // Predicated region
      $region45: #{down_lpf_forward.6} parent=39 // pred_check
        %p945 = pneg %p944
      $region46: #{down_lpf_forward.6} parent=39 // pred_check_branch
        %947 = sbr.rel (%p945) target = $region48
      $region47: #{down_lpf_forward.6} parent=39 // pred_region
        %v948 = vld [vmem:[%s432] sm:$0x3]
        %v949 = vadd.f32 %v948, %v937
        %vm950 = vcmask 58368
        %951 = vst.msk [vmem:[%s432] sm:$0x3] %vm950, %v949
      $region48: #{down_lpf_forward.6} parent=39 // pred_fallthru
        _
      %s952 = smul.u32 8, %s23
      %p953 = scmp.lt.s32.totalorder %s22, 1
      %s954 = scalar_select %p953, %s22, 1
      %p955 = scmp.lt.s32.totalorder %s952, 7
      %s956 = scalar_select %p955, %s952, 7
      %s957 = smul.addr %s954, 8
      %s958 = sadd.s32 %s956, %s957
      %s959 = smul.addr %s958, 8
      %s960 = scalar_lea.vmem %s5, %s959
      %p961 = scmp.lt.s32.totalorder %s22, 1
      %s962 = scalar_select %p961, %s22, 1
      %s963 = smul.addr %s962, 2
      %s964 = scalar_lea.vmem %s6, %s963
      // Predicated region
      $region49: #{down_lpf_forward.6} parent=39 // pred_check
        %p965 = pneg %p186
      $region50: #{down_lpf_forward.6} parent=39 // pred_check_branch
        %967 = sbr.rel (%p965) target = $region52
      $region51: #{down_lpf_forward.6} parent=39 // pred_region
        %s968 = smul.u32 8, %s23
      $region52: #{down_lpf_forward.6} parent=39 // pred_fallthru
        _
      // Predicated region
      $region53: #{down_lpf_forward.6} parent=39 // pred_check
        %p969 = pneg %p212
      $region54: #{down_lpf_forward.6} parent=39 // pred_check_branch
        %971 = sbr.rel (%p969) target = $region56
      $region55: #{down_lpf_forward.6} parent=39 // pred_region
        _
      $region56: #{down_lpf_forward.6} parent=39 // pred_fallthru
        _
    $region40: #{down_lpf_forward.6} parent=5 // pred_fallthru
      _
    %p972 = scmp.le.s32.totalorder 2, %s13
    // Predicated region
    $region57: #{down_lpf_forward.6} parent=5 // pred_check
      %p973 = pneg %p972
    $region58: #{down_lpf_forward.6} parent=5 // pred_check_branch
      %975 = sbr.rel (%p973) target = $region60
    $region59: #{down_lpf_forward.6} parent=5 // pred_region
      %s976 = ssub.s32 %s13, 2
      // Predicated region
      $region61: #{down_lpf_forward.6} parent=59 // pred_check
        %p977 = pneg %p192
      $region62: #{down_lpf_forward.6} parent=59 // pred_check_branch
        %979 = sbr.rel (%p977) target = $region64
      $region63: #{down_lpf_forward.6} parent=59 // pred_region
        %s980 = smul.u32 8, %s25
        %p981 = scmp.lt.s32.totalorder %s24, 1
        %s982 = scalar_select %p981, %s24, 1
        %p983 = scmp.lt.s32.totalorder %s980, 7
        %s984 = scalar_select %p983, %s980, 7
        %s985 = smul.addr %s982, 8
        %s986 = sadd.s32 %s984, %s985
        %s987 = smul.addr %s986, 8
        %s988 = scalar_lea.vmem %s5, %s987
      $region64: #{down_lpf_forward.6} parent=59 // pred_fallthru
        _
      // Predicated region
      $region65: #{down_lpf_forward.6} parent=59 // pred_check
        %p989 = pneg %p218
      $region66: #{down_lpf_forward.6} parent=59 // pred_check_branch
        %991 = sbr.rel (%p989) target = $region68
      $region67: #{down_lpf_forward.6} parent=59 // pred_region
        %p992 = scmp.lt.s32.totalorder %s24, 1
        %s993 = scalar_select %p992, %s24, 1
        %s994 = smul.addr %s993, 2
        %s995 = scalar_lea.vmem %s6, %s994
      $region68: #{down_lpf_forward.6} parent=59 // pred_fallthru
        _
    $region60: #{down_lpf_forward.6} parent=5 // pred_fallthru
      _
  $region6: #{down_lpf_forward.6} parent=0 // loop_footer
    %s17 = sadd.s32 1, %s13
  $region7: #{down_lpf_forward.6} parent=0 // loop_footer_branch
    %12 = sbr.rel target = $region3
  $region8: #{down_lpf_forward.6} parent=0 // loop_exit
    _

// kernel: down_lpf_forward.8
$region0: #{down_lpf_forward.8}
  #allocation0 [shape = 'u32[]', space=smem, size = 0x4, offset = 0x4, fixed_abs, tag = 'smem constant byte address 0x4 - core index']
  #allocation1 [shape = 'u32[72,128]{1,0:T(1,128)}', space=vmem, size = 0x9000, scoped, tag = 'internal scratch']
  %s0 = inlined_call_operand.vmem [shape: f32[2,10,10,8], index: 0, kind: input, shape index: {}, may-alias: {0,1,2}]
  %s1 = inlined_call_operand.vmem [shape: f32[2,10,10,8], index: 1, kind: input, shape index: {}, may-alias: {0,1,2}]
  %s2 = inlined_call_operand.vmem [shape: f32[2,10,10,8], index: 2, kind: input, shape index: {}, may-alias: {0,1,2}]
  %s3 = inlined_call_operand.vmem [shape: f32[72,8], index: 3, kind: input, shape index: {}]
  %s4 = inlined_call_operand.vmem [shape: f32[1,8], index: 4, kind: input, shape index: {}]
  %s5 = inlined_call_operand.vmem [shape: f32[2,8,8,8], index: 5, kind: output, shape index: {0}]
  %s6 = inlined_call_operand.vmem [shape: f32[2,2,8], index: 6, kind: output, shape index: {1}]
  %7 = xla_tuple %s5, %s6
  %s8 = sld [smem:[#allocation0]]
  $region69: #{down_lpf_forward.8} parent=0
    _
  %s10 = ssub.s32 1, %s8
  %s11 = scalar_select 0, %s10, %s8
  loop: start=0, step=1, limit=4
  $region2: #{down_lpf_forward.8} parent=0 // loop_pre_header
    _
  $region3: #{down_lpf_forward.8} parent=0 // loop_header
    %s13 = sphi 0, %s17
    %p14 = scmp.ge.s32.totalorder %s13, 4
    %s20 = sphi 0, %s32
    %s21 = sphi 0, %s28
    %s22 = sphi 0, %s20
    %s23 = sphi 0, %s21
    %s24 = sphi 0, %s22
    %s25 = sphi 0, %s23
    %s37 = sphi 0, %s39
    %s40 = sphi 0, %s37
    %s41 = sphi 0, %s40
    %s57 = sphi 0, %s41
    %s69 = sphi 0, %s71
    %s72 = sphi 0, %s69
    %s73 = sphi 0, %s72
    %s89 = sphi 0, %s73
    %s103 = sphi 0, %s105
    %s106 = sphi 0, %s103
    %s107 = sphi 0, %s106
    %s123 = sphi 0, %s107
    %s127 = sphi 0, %s127
    %s129 = sphi 0, %s127
    %s130 = sphi 0, %s129
    %s144 = sphi 0, %s130
    %s148 = sphi 0, %s148
    %s150 = sphi 0, %s148
    %s151 = sphi 0, %s150
    %s165 = sphi 0, %s151
    %s173 = sphi 0, %s175
    %s176 = sphi 0, %s173
    %s177 = sphi 0, %s176
    %s193 = sphi 0, %s177
    %s199 = sphi 0, %s201
    %s202 = sphi 0, %s199
    %s203 = sphi 0, %s202
    %s219 = sphi 0, %s203
  $region4: #{down_lpf_forward.8} parent=0 // loop_header_branch
    %16 = sbr.rel (%p14) target = $region8
  $region5: #{down_lpf_forward.8} parent=0 // loop_body
    %s18 = ssub.s32 %s13, 1
    %s19 = ssub.s32 %s13, 2
    %s26 = sadd.s32 1, %s21
    %p27 = scmp.ge.s32.totalorder %s26, 1
    %s28 = scalar_select %p27, 0, %s26
    %s29 = sadd.s32 1, %s20
    %s30 = scalar_select %p27, %s29, %s20
    %p31 = scmp.ge.s32.totalorder %s30, 2
    %s32 = scalar_select %p31, 0, %s30
    %s33 = ssub.s32 %s20, %s32
    %s34 = ssub.s32 %s21, %s28
    %s35 = sor.u32 %s33, %s34
    %p36 = scmp.eq.s32.totalorder %s35, 0
    %s38 = sadd.s32 %s37, 1
    %s39 = scalar_select %p36, %s37, %s38
    %p42 = pneg %p36
    %p43 = scmp.eq.s32.totalorder %s13, 1
    %p44 = por %p42, %p43
    %p45 = scmp.ne.s32.totalorder %s37, %s40
    %p46 = scmp.eq.s32.totalorder %s13, 0
    %p47 = por %p45, %p46
    %p48 = scmp.ne.s32.totalorder %s37, %s40
    %p49 = scmp.eq.s32.totalorder %s18, 1
    %p50 = por %p48, %p49
    %p51 = scmp.ne.s32.totalorder %s40, %s41
    %p52 = scmp.eq.s32.totalorder %s18, 0
    %p53 = por %p51, %p52
    %p54 = scmp.ne.s32.totalorder %s40, %s41
    %p55 = scmp.eq.s32.totalorder %s19, 1
    %p56 = por %p54, %p55
    %p58 = scmp.ne.s32.totalorder %s41, %s57
    %p59 = scmp.eq.s32.totalorder %s19, 0
    %p60 = por %p58, %p59
    %s61 = sadd.s32 %s21, 1
    %s62 = smul.u32 %s61, 8
    %s63 = sadd.s32 %s28, 1
    %s64 = smul.u32 %s63, 8
    %s65 = ssub.s32 %s20, %s32
    %s66 = ssub.s32 %s62, %s64
    %s67 = sor.u32 %s65, %s66
    %p68 = scmp.eq.s32.totalorder %s67, 0
    %s70 = sadd.s32 %s69, 1
    %s71 = scalar_select %p68, %s69, %s70
    %p74 = pneg %p68
    %p75 = scmp.eq.s32.totalorder %s13, 1
    %p76 = por %p74, %p75
    %p77 = scmp.ne.s32.totalorder %s69, %s72
    %p78 = scmp.eq.s32.totalorder %s13, 0
    %p79 = por %p77, %p78
    %p80 = scmp.ne.s32.totalorder %s69, %s72
    %p81 = scmp.eq.s32.totalorder %s18, 1
    %p82 = por %p80, %p81
    %p83 = scmp.ne.s32.totalorder %s72, %s73
    %p84 = scmp.eq.s32.totalorder %s18, 0
    %p85 = por %p83, %p84
    %p86 = scmp.ne.s32.totalorder %s72, %s73
    %p87 = scmp.eq.s32.totalorder %s19, 1
    %p88 = por %p86, %p87
    %p90 = scmp.ne.s32.totalorder %s73, %s89
    %p91 = scmp.eq.s32.totalorder %s19, 0
    %p92 = por %p90, %p91
    %s93 = sadd.s32 %s21, 1
    %s94 = smul.u32 %s93, 8
    %s95 = sadd.s32 %s94, 1
    %s96 = sadd.s32 %s28, 1
    %s97 = smul.u32 %s96, 8
    %s98 = sadd.s32 %s97, 1
    %s99 = ssub.s32 %s20, %s32
    %s100 = ssub.s32 %s95, %s98
    %s101 = sor.u32 %s99, %s100
    %p102 = scmp.eq.s32.totalorder %s101, 0
    %s104 = sadd.s32 %s103, 1
    %s105 = scalar_select %p102, %s103, %s104
    %p108 = pneg %p102
    %p109 = scmp.eq.s32.totalorder %s13, 1
    %p110 = por %p108, %p109
    %p111 = scmp.ne.s32.totalorder %s103, %s106
    %p112 = scmp.eq.s32.totalorder %s13, 0
    %p113 = por %p111, %p112
    %p114 = scmp.ne.s32.totalorder %s103, %s106
    %p115 = scmp.eq.s32.totalorder %s18, 1
    %p116 = por %p114, %p115
    %p117 = scmp.ne.s32.totalorder %s106, %s107
    %p118 = scmp.eq.s32.totalorder %s18, 0
    %p119 = por %p117, %p118
    %p120 = scmp.ne.s32.totalorder %s106, %s107
    %p121 = scmp.eq.s32.totalorder %s19, 1
    %p122 = por %p120, %p121
    %p124 = scmp.ne.s32.totalorder %s107, %s123
    %p125 = scmp.eq.s32.totalorder %s19, 0
    %p126 = por %p124, %p125
    %s128 = sadd.s32 %s127, 1
    %p131 = scmp.eq.s32.totalorder %s13, 1
    %p132 = scmp.ne.s32.totalorder %s127, %s129
    %p133 = scmp.eq.s32.totalorder %s13, 0
    %p134 = por %p132, %p133
    %p135 = scmp.ne.s32.totalorder %s127, %s129
    %p136 = scmp.eq.s32.totalorder %s18, 1
    %p137 = por %p135, %p136
    %p138 = scmp.ne.s32.totalorder %s129, %s130
    %p139 = scmp.eq.s32.totalorder %s18, 0
    %p140 = por %p138, %p139
    %p141 = scmp.ne.s32.totalorder %s129, %s130
    %p142 = scmp.eq.s32.totalorder %s19, 1
    %p143 = por %p141, %p142
    %p145 = scmp.ne.s32.totalorder %s130, %s144
    %p146 = scmp.eq.s32.totalorder %s19, 0
    %p147 = por %p145, %p146
    %s149 = sadd.s32 %s148, 1
    %p152 = scmp.eq.s32.totalorder %s13, 1
    %p153 = scmp.ne.s32.totalorder %s148, %s150
    %p154 = scmp.eq.s32.totalorder %s13, 0
    %p155 = por %p153, %p154
    %p156 = scmp.ne.s32.totalorder %s148, %s150
    %p157 = scmp.eq.s32.totalorder %s18, 1
    %p158 = por %p156, %p157
    %p159 = scmp.ne.s32.totalorder %s150, %s151
    %p160 = scmp.eq.s32.totalorder %s18, 0
    %p161 = por %p159, %p160
    %p162 = scmp.ne.s32.totalorder %s150, %s151
    %p163 = scmp.eq.s32.totalorder %s19, 1
    %p164 = por %p162, %p163
    %p166 = scmp.ne.s32.totalorder %s151, %s165
    %p167 = scmp.eq.s32.totalorder %s19, 0
    %p168 = por %p166, %p167
    %s169 = ssub.s32 %s20, %s32
    %s170 = ssub.s32 %s21, %s28
    %s171 = sor.u32 %s169, %s170
    %p172 = scmp.eq.s32.totalorder %s171, 0
    %s174 = sadd.s32 %s173, 1
    %s175 = scalar_select %p172, %s173, %s174
    %p178 = pneg %p172
    %p179 = scmp.eq.s32.totalorder %s13, 1
    %p180 = por %p178, %p179
    %p181 = scmp.ne.s32.totalorder %s173, %s176
    %p182 = scmp.eq.s32.totalorder %s13, 0
    %p183 = por %p181, %p182
    %p184 = scmp.ne.s32.totalorder %s173, %s176
    %p185 = scmp.eq.s32.totalorder %s18, 1
    %p186 = por %p184, %p185
    %p187 = scmp.ne.s32.totalorder %s176, %s177
    %p188 = scmp.eq.s32.totalorder %s18, 0
    %p189 = por %p187, %p188
    %p190 = scmp.ne.s32.totalorder %s176, %s177
    %p191 = scmp.eq.s32.totalorder %s19, 1
    %p192 = por %p190, %p191
    %p194 = scmp.ne.s32.totalorder %s177, %s193
    %p195 = scmp.eq.s32.totalorder %s19, 0
    %p196 = por %p194, %p195
    %s197 = ssub.s32 %s20, %s32
    %p198 = scmp.eq.s32.totalorder %s197, 0
    %s200 = sadd.s32 %s199, 1
    %s201 = scalar_select %p198, %s199, %s200
    %p204 = pneg %p198
    %p205 = scmp.eq.s32.totalorder %s13, 1
    %p206 = por %p204, %p205
    %p207 = scmp.ne.s32.totalorder %s199, %s202
    %p208 = scmp.eq.s32.totalorder %s13, 0
    %p209 = por %p207, %p208
    %p210 = scmp.ne.s32.totalorder %s199, %s202
    %p211 = scmp.eq.s32.totalorder %s18, 1
    %p212 = por %p210, %p211
    %p213 = scmp.ne.s32.totalorder %s202, %s203
    %p214 = scmp.eq.s32.totalorder %s18, 0
    %p215 = por %p213, %p214
    %p216 = scmp.ne.s32.totalorder %s202, %s203
    %p217 = scmp.eq.s32.totalorder %s19, 1
    %p218 = por %p216, %p217
    %p220 = scmp.ne.s32.totalorder %s203, %s219
    %p221 = scmp.eq.s32.totalorder %s19, 0
    %p222 = por %p220, %p221
    %p223 = scmp.le.s32.totalorder 1, %s13
    %p224 = scmp.lt.s32.totalorder %s13, 3
    %p225 = pnand %p223, %p224
    %p226 = pneg %p225
    // Predicated region
    $region9: #{down_lpf_forward.8} parent=5 // pred_check
      _
    $region10: #{down_lpf_forward.8} parent=5 // pred_check_branch
      %228 = sbr.rel (%p225) target = $region12
    $region11: #{down_lpf_forward.8} parent=5 // pred_region
      %s229 = ssub.s32 %s13, 1
      // Predicated region
      $region13: #{down_lpf_forward.8} parent=11 // pred_check
        %p230 = pneg %p140
      $region14: #{down_lpf_forward.8} parent=11 // pred_check_branch
        %232 = sbr.rel (%p230) target = $region16
      $region15: #{down_lpf_forward.8} parent=11 // pred_region
        _
      $region16: #{down_lpf_forward.8} parent=11 // pred_fallthru
        _
      // Predicated region
      $region17: #{down_lpf_forward.8} parent=11 // pred_check
        %p233 = pneg %p161
      $region18: #{down_lpf_forward.8} parent=11 // pred_check_branch
        %235 = sbr.rel (%p233) target = $region20
      $region19: #{down_lpf_forward.8} parent=11 // pred_region
        _
      $region20: #{down_lpf_forward.8} parent=11 // pred_fallthru
        _
    $region12: #{down_lpf_forward.8} parent=5 // pred_fallthru
      _
    %p236 = scmp.lt.s32.totalorder %s13, 2
    // Predicated region
    $region21: #{down_lpf_forward.8} parent=5 // pred_check
      %p237 = pneg %p236
    $region22: #{down_lpf_forward.8} parent=5 // pred_check_branch
      %239 = sbr.rel (%p237) target = $region24
    $region23: #{down_lpf_forward.8} parent=5 // pred_region
      // Predicated region
      $region25: #{down_lpf_forward.8} parent=23 // pred_check
        %p240 = pneg %p47
      $region26: #{down_lpf_forward.8} parent=23 // pred_check_branch
        %242 = sbr.rel (%p240) target = $region28
      $region27: #{down_lpf_forward.8} parent=23 // pred_region
        %s243 = smul.u32 8, %s21
        %s244 = ssub.s32 10, %s243
        %p245 = scmp.lt.s32.totalorder %s244, 8
        %s246 = scalar_select %p245, %s244, 8
        %s247 = smul.u32 8, %s246
        %s248 = smul.u32 %s247, 2
        %p249 = scmp.lt.s32.totalorder %s20, 1
        %s250 = scalar_select %p249, %s20, 1
        %p251 = scmp.lt.s32.totalorder %s243, 9
        %s252 = scalar_select %p251, %s243, 9
        %s253 = smul.addr %s252, 2
        %s254 = smul.addr %s250, 20
        %s255 = sadd.s32 %s253, %s254
        %s256 = smul.addr %s255, 8
        %s257 = scalar_lea.vmem %s0, %s256
        %s258 = smul.u32 8, %s21
        %s259 = ssub.s32 10, %s258
        %p260 = scmp.lt.s32.totalorder %s259, 8
        %s261 = scalar_select %p260, %s259, 8
        %s262 = smul.u32 8, %s261
        %s263 = smul.u32 %s262, 2
      $region28: #{down_lpf_forward.8} parent=23 // pred_fallthru
        _
      // Predicated region
      $region29: #{down_lpf_forward.8} parent=23 // pred_check
        %p264 = pneg %p79
      $region30: #{down_lpf_forward.8} parent=23 // pred_check_branch
        %266 = sbr.rel (%p264) target = $region32
      $region31: #{down_lpf_forward.8} parent=23 // pred_region
        %s267 = sadd.s32 %s21, 1
        %s268 = smul.u32 %s267, 8
        %p269 = scmp.lt.s32.totalorder %s20, 1
        %s270 = scalar_select %p269, %s20, 1
        %p271 = scmp.lt.s32.totalorder %s268, 9
        %s272 = scalar_select %p271, %s268, 9
        %s273 = smul.addr %s272, 2
        %s274 = smul.addr %s270, 20
        %s275 = sadd.s32 %s273, %s274
        %s276 = smul.addr %s275, 8
        %s277 = scalar_lea.vmem %s1, %s276
        %s278 = sadd.s32 %s21, 1
        %s279 = smul.u32 %s278, 8
      $region32: #{down_lpf_forward.8} parent=23 // pred_fallthru
        _
      // Predicated region
      $region33: #{down_lpf_forward.8} parent=23 // pred_check
        %p280 = pneg %p113
      $region34: #{down_lpf_forward.8} parent=23 // pred_check_branch
        %282 = sbr.rel (%p280) target = $region36
      $region35: #{down_lpf_forward.8} parent=23 // pred_region
        %s283 = sadd.s32 %s21, 1
        %s284 = smul.u32 %s283, 8
        %s285 = sadd.s32 %s284, 1
        %p286 = scmp.lt.s32.totalorder %s20, 1
        %s287 = scalar_select %p286, %s20, 1
        %p288 = scmp.lt.s32.totalorder %s285, 9
        %s289 = scalar_select %p288, %s285, 9
        %s290 = smul.addr %s289, 2
        %s291 = smul.addr %s287, 20
        %s292 = sadd.s32 %s290, %s291
        %s293 = smul.addr %s292, 8
        %s294 = scalar_lea.vmem %s2, %s293
        %s295 = sadd.s32 %s21, 1
        %s296 = smul.u32 %s295, 8
        %s297 = sadd.s32 %s296, 1
      $region36: #{down_lpf_forward.8} parent=23 // pred_fallthru
        _
    $region24: #{down_lpf_forward.8} parent=5 // pred_fallthru
      _
    %p298 = scmp.le.s32.totalorder 1, %s13
    %p299 = scmp.lt.s32.totalorder %s13, 3
    %p300 = pnand %p298, %p299
    %p301 = pneg %p300
    // Predicated region
    $region37: #{down_lpf_forward.8} parent=5 // pred_check
      _
    $region38: #{down_lpf_forward.8} parent=5 // pred_check_branch
      %303 = sbr.rel (%p300) target = $region40
    $region39: #{down_lpf_forward.8} parent=5 // pred_region
      %s304 = ssub.s32 %s13, 1
      %s305 = smul.u32 8, %s23
      %s306 = ssub.s32 10, %s305
      %p307 = scmp.lt.s32.totalorder %s306, 8
      %s308 = scalar_select %p307, %s306, 8
      %s309 = smul.u32 8, %s308
      %s310 = smul.u32 %s309, 2
      %p311 = scmp.lt.s32.totalorder %s22, 1
      %s312 = scalar_select %p311, %s22, 1
      %p313 = scmp.lt.s32.totalorder %s305, 9
      %s314 = scalar_select %p313, %s305, 9
      %s315 = smul.addr %s314, 2
      %s316 = smul.addr %s312, 20
      %s317 = sadd.s32 %s315, %s316
      %s318 = smul.addr %s317, 8
      %s319 = scalar_lea.vmem %s0, %s318
      %p320 = pneg %p53
      %p321 = pneg %p50
      %s322 = sadd.s32 %s23, 1
      %s323 = smul.u32 %s322, 8
      %p324 = scmp.lt.s32.totalorder %s22, 1
      %s325 = scalar_select %p324, %s22, 1
      %p326 = scmp.lt.s32.totalorder %s323, 9
      %s327 = scalar_select %p326, %s323, 9
      %s328 = smul.addr %s327, 2
      %s329 = smul.addr %s325, 20
      %s330 = sadd.s32 %s328, %s329
      %s331 = smul.addr %s330, 8
      %s332 = scalar_lea.vmem %s1, %s331
      %p333 = pneg %p85
      %p334 = pneg %p82
      %s335 = sadd.s32 %s23, 1
      %s336 = smul.u32 %s335, 8
      %s337 = sadd.s32 %s336, 1
      %p338 = scmp.lt.s32.totalorder %s22, 1
      %s339 = scalar_select %p338, %s22, 1
      %p340 = scmp.lt.s32.totalorder %s337, 9
      %s341 = scalar_select %p340, %s337, 9
      %s342 = smul.addr %s341, 2
      %s343 = smul.addr %s339, 20
      %s344 = sadd.s32 %s342, %s343
      %s345 = smul.addr %s344, 8
      %s346 = scalar_lea.vmem %s2, %s345
      %p347 = pneg %p119
      %p348 = pneg %p116
      %p349 = pneg %p140
      %p350 = pneg %p137
      %p351 = pneg %p161
      %p352 = pneg %p158
      %p353 = pneg %p189
      %p354 = pneg %p186
      %s355 = smul.u32 8, %s23
      %p356 = scmp.lt.s32.totalorder %s22, 1
      %s357 = scalar_select %p356, %s22, 1
      %p358 = scmp.lt.s32.totalorder %s355, 7
      %s359 = scalar_select %p358, %s355, 7
      %s360 = smul.addr %s357, 8
      %s361 = sadd.s32 %s359, %s360
      %s362 = smul.addr %s361, 8
      %s363 = scalar_lea.vmem %s5, %s362
      %p364 = pneg %p215
      %p365 = pneg %p212
      %p366 = scmp.lt.s32.totalorder %s22, 1
      %s367 = scalar_select %p366, %s22, 1
      %s368 = smul.addr %s367, 2
      %s369 = scalar_lea.vmem %s6, %s368
      %s370 = smul.u32 8, %s23
      %s371 = ssub.s32 10, %s370
      %p372 = scmp.lt.s32.totalorder %s371, 8
      %s373 = scalar_select %p372, %s371, 8
      %s374 = smul.u32 8, %s373
      %s375 = smul.u32 %s374, 2
      %p376 = scmp.lt.s32.totalorder %s22, 1
      %s377 = scalar_select %p376, %s22, 1
      %p378 = scmp.lt.s32.totalorder %s370, 9
      %s379 = scalar_select %p378, %s370, 9
      %s380 = smul.addr %s379, 2
      %s381 = smul.addr %s377, 20
      %s382 = sadd.s32 %s380, %s381
      %s383 = smul.addr %s382, 8
      %s384 = scalar_lea.vmem %s0, %s383
      %s385 = smul.u32 8, %s23
      %s386 = ssub.s32 10, %s385
      %p387 = scmp.lt.s32.totalorder %s386, 8
      %s388 = scalar_select %p387, %s386, 8
      %s389 = smul.u32 8, %s388
      %s390 = smul.u32 %s389, 2
      %s391 = sadd.s32 %s23, 1
      %s392 = smul.u32 %s391, 8
      %p393 = scmp.lt.s32.totalorder %s22, 1
      %s394 = scalar_select %p393, %s22, 1
      %p395 = scmp.lt.s32.totalorder %s392, 9
      %s396 = scalar_select %p395, %s392, 9
      %s397 = smul.addr %s396, 2
      %s398 = smul.addr %s394, 20
      %s399 = sadd.s32 %s397, %s398
      %s400 = smul.addr %s399, 8
      %s401 = scalar_lea.vmem %s1, %s400
      %s402 = sadd.s32 %s23, 1
      %s403 = smul.u32 %s402, 8
      %s404 = sadd.s32 %s23, 1
      %s405 = smul.u32 %s404, 8
      %s406 = sadd.s32 %s405, 1
      %p407 = scmp.lt.s32.totalorder %s22, 1
      %s408 = scalar_select %p407, %s22, 1
      %p409 = scmp.lt.s32.totalorder %s406, 9
      %s410 = scalar_select %p409, %s406, 9
      %s411 = smul.addr %s410, 2
      %s412 = smul.addr %s408, 20
      %s413 = sadd.s32 %s411, %s412
      %s414 = smul.addr %s413, 8
      %s415 = scalar_lea.vmem %s2, %s414
      %s416 = sadd.s32 %s23, 1
      %s417 = smul.u32 %s416, 8
      %s418 = sadd.s32 %s417, 1
      %s419 = smul.u32 8, %s23
      %p420 = scmp.lt.s32.totalorder %s22, 1
      %s421 = scalar_select %p420, %s22, 1
      %p422 = scmp.lt.s32.totalorder %s419, 7
      %s423 = scalar_select %p422, %s419, 7
      %s424 = smul.addr %s421, 8
      %s425 = sadd.s32 %s423, %s424
      %s426 = smul.addr %s425, 8
      %s427 = scalar_lea.vmem %s5, %s426
      %s428 = smul.u32 8, %s23
      %p429 = scmp.lt.s32.totalorder %s22, 1
      %s430 = scalar_select %p429, %s22, 1
      %s431 = smul.addr %s430, 2
      %s432 = scalar_lea.vmem %s6, %s431
      %v433 = vld [vmem:[%s384] sm:$0xff]
      %v434 = vld [vmem:[%s384 + $0x8] sm:$0x3]
      %v435 = vld [vmem:[%s384 + $0x10] sm:$0xff]
      %v436 = vld [vmem:[%s384 + $0x18] sm:$0x3]
      %v437 = vld [vmem:[%s384 + $0x20] sm:$0xff]
      %v438 = vld [vmem:[%s384 + $0x28] sm:$0x3]
      %v439 = vld [vmem:[%s384 + $0x30] sm:$0xff]
      %v440 = vld [vmem:[%s384 + $0x38] sm:$0x3]
      %v441 = vld [vmem:[%s384 + $0x40] sm:$0xff]
      %v442 = vld [vmem:[%s384 + $0x48] sm:$0x3]
      %v443 = vld [vmem:[%s384 + $0x50] sm:$0xff]
      %v444 = vld [vmem:[%s384 + $0x58] sm:$0x3]
      %v445 = vld [vmem:[%s384 + $0x60] sm:$0xff]
      %v446 = vld [vmem:[%s384 + $0x68] sm:$0x3]
      %v447 = vld [vmem:[%s384 + $0x70] sm:$0xff]
      %v448 = vld [vmem:[%s384 + $0x78] sm:$0x3]
      %v449 = vld [vmem:[%s401] sm:$0xff]
      %v450 = vld [vmem:[%s401 + $0x8] sm:$0x3]
      %v451 = vld [vmem:[%s415] sm:$0xff]
      %v452 = vld [vmem:[%s415 + $0x8] sm:$0x3]
      %vm469 = vcmask 1046528
      %v470 = vrot.slane %v433, 1
      %v471 = vrot.slane %v434, 1
      %v472 = vsel %vm469, %v470, %v471
      %v473 = vrot.slane %v435, 1
      %v474 = vrot.slane %v436, 1
      %v475 = vsel %vm469, %v473, %v474
      %v476 = vrot.slane %v437, 1
      %v477 = vrot.slane %v438, 1
      %v478 = vsel %vm469, %v476, %v477
      %v479 = vrot.slane %v439, 1
      %v480 = vrot.slane %v440, 1
      %v481 = vsel %vm469, %v479, %v480
      %v482 = vrot.slane %v441, 1
      %v483 = vrot.slane %v442, 1
      %v484 = vsel %vm469, %v482, %v483
      %v485 = vrot.slane %v443, 1
      %v486 = vrot.slane %v444, 1
      %v487 = vsel %vm469, %v485, %v486
      %v488 = vrot.slane %v445, 1
      %v489 = vrot.slane %v446, 1
      %v490 = vsel %vm469, %v488, %v489
      %v491 = vrot.slane %v447, 1
      %v492 = vrot.slane %v448, 1
      %v493 = vsel %vm469, %v491, %v492
      %vm494 = vcmask 1045504
      %v495 = vrot.slane %v433, 2
      %v496 = vrot.slane %v434, 2
      %v497 = vsel %vm494, %v495, %v496
      %v498 = vrot.slane %v435, 2
      %v499 = vrot.slane %v436, 2
      %v500 = vsel %vm494, %v498, %v499
      %v501 = vrot.slane %v437, 2
      %v502 = vrot.slane %v438, 2
      %v503 = vsel %vm494, %v501, %v502
      %v504 = vrot.slane %v439, 2
      %v505 = vrot.slane %v440, 2
      %v506 = vsel %vm494, %v504, %v505
      %v507 = vrot.slane %v441, 2
      %v508 = vrot.slane %v442, 2
      %v509 = vsel %vm494, %v507, %v508
      %v510 = vrot.slane %v443, 2
      %v511 = vrot.slane %v444, 2
      %v512 = vsel %vm494, %v510, %v511
      %v513 = vrot.slane %v445, 2
      %v514 = vrot.slane %v446, 2
      %v515 = vsel %vm494, %v513, %v514
      %v516 = vrot.slane %v447, 2
      %v517 = vrot.slane %v448, 2
      %v518 = vsel %vm494, %v516, %v517
      %v521 = vrot.slane %v449, 1
      %v522 = vrot.slane %v450, 1
      %v523 = vsel %vm469, %v521, %v522
      %v524 = vrot.slane %v449, 2
      %v525 = vrot.slane %v450, 2
      %v526 = vsel %vm494, %v524, %v525
      %v529 = vrot.slane %v451, 1
      %v530 = vrot.slane %v452, 1
      %v531 = vsel %vm469, %v529, %v530
      %v532 = vrot.slane %v451, 2
      %v533 = vrot.slane %v452, 2
      %v534 = vsel %vm494, %v532, %v533
      %535 = vrot.lane.b32.xlu0 %v472, 8
      %v536 = vpop.permute.xlu0 %535
      %537 = vrot.lane.b32.xlu0 %v475, 8
      %v538 = vpop.permute.xlu0 %537
      %539 = vrot.lane.b32.xlu0 %v478, 8
      %v540 = vpop.permute.xlu0 %539
      %541 = vrot.lane.b32.xlu0 %v481, 8
      %v542 = vpop.permute.xlu0 %541
      %543 = vrot.lane.b32.xlu0 %v484, 8
      %v544 = vpop.permute.xlu0 %543
      %545 = vrot.lane.b32.xlu0 %v487, 8
      %v546 = vpop.permute.xlu0 %545
      %547 = vrot.lane.b32.xlu0 %v490, 8
      %v548 = vpop.permute.xlu0 %547
      %549 = vrot.lane.b32.xlu0 %v493, 8
      %v550 = vpop.permute.xlu0 %549
      %559 = vrot.lane.b32.xlu0 %v497, 16
      %v560 = vpop.permute.xlu0 %559
      %561 = vrot.lane.b32.xlu0 %v500, 16
      %v562 = vpop.permute.xlu0 %561
      %563 = vrot.lane.b32.xlu0 %v503, 16
      %v564 = vpop.permute.xlu0 %563
      %565 = vrot.lane.b32.xlu0 %v506, 16
      %v566 = vpop.permute.xlu0 %565
      %567 = vrot.lane.b32.xlu0 %v509, 16
      %v568 = vpop.permute.xlu0 %567
      %569 = vrot.lane.b32.xlu0 %v512, 16
      %v570 = vpop.permute.xlu0 %569
      %571 = vrot.lane.b32.xlu0 %v515, 16
      %v572 = vpop.permute.xlu0 %571
      %573 = vrot.lane.b32.xlu0 %v518, 16
      %v574 = vpop.permute.xlu0 %573
      %583 = vrot.lane.b32.xlu0 %v435, 24
      %v584 = vpop.permute.xlu0 %583
      %585 = vrot.lane.b32.xlu0 %v437, 24
      %v586 = vpop.permute.xlu0 %585
      %587 = vrot.lane.b32.xlu0 %v439, 24
      %v588 = vpop.permute.xlu0 %587
      %589 = vrot.lane.b32.xlu0 %v441, 24
      %v590 = vpop.permute.xlu0 %589
      %591 = vrot.lane.b32.xlu0 %v443, 24
      %v592 = vpop.permute.xlu0 %591
      %593 = vrot.lane.b32.xlu0 %v445, 24
      %v594 = vpop.permute.xlu0 %593
      %595 = vrot.lane.b32.xlu0 %v447, 24
      %v596 = vpop.permute.xlu0 %595
      %597 = vrot.lane.b32.xlu0 %v449, 24
      %v598 = vpop.permute.xlu0 %597
      %607 = vrot.lane.b32.xlu0 %v475, 32
      %v608 = vpop.permute.xlu0 %607
      %609 = vrot.lane.b32.xlu0 %v478, 32
      %v610 = vpop.permute.xlu0 %609
      %611 = vrot.lane.b32.xlu0 %v481, 32
      %v612 = vpop.permute.xlu0 %611
      %613 = vrot.lane.b32.xlu0 %v484, 32
      %v614 = vpop.permute.xlu0 %613
      %615 = vrot.lane.b32.xlu0 %v487, 32
      %v616 = vpop.permute.xlu0 %615
      %617 = vrot.lane.b32.xlu0 %v490, 32
      %v618 = vpop.permute.xlu0 %617
      %619 = vrot.lane.b32.xlu0 %v493, 32
      %v620 = vpop.permute.xlu0 %619
      %621 = vrot.lane.b32.xlu0 %v523, 32
      %v622 = vpop.permute.xlu0 %621
      %631 = vrot.lane.b32.xlu0 %v500, 40
      %v632 = vpop.permute.xlu0 %631
      %633 = vrot.lane.b32.xlu0 %v503, 40
      %v634 = vpop.permute.xlu0 %633
      %635 = vrot.lane.b32.xlu0 %v506, 40
      %v636 = vpop.permute.xlu0 %635
      %637 = vrot.lane.b32.xlu0 %v509, 40
      %v638 = vpop.permute.xlu0 %637
      %639 = vrot.lane.b32.xlu0 %v512, 40
      %v640 = vpop.permute.xlu0 %639
      %641 = vrot.lane.b32.xlu0 %v515, 40
      %v642 = vpop.permute.xlu0 %641
      %643 = vrot.lane.b32.xlu0 %v518, 40
      %v644 = vpop.permute.xlu0 %643
      %645 = vrot.lane.b32.xlu0 %v526, 40
      %v646 = vpop.permute.xlu0 %645
      %655 = vrot.lane.b32.xlu0 %v437, 48
      %v656 = vpop.permute.xlu0 %655
      %657 = vrot.lane.b32.xlu0 %v439, 48
      %v658 = vpop.permute.xlu0 %657
      %659 = vrot.lane.b32.xlu0 %v441, 48
      %v660 = vpop.permute.xlu0 %659
      %661 = vrot.lane.b32.xlu0 %v443, 48
      %v662 = vpop.permute.xlu0 %661
      %663 = vrot.lane.b32.xlu0 %v445, 48
      %v664 = vpop.permute.xlu0 %663
      %665 = vrot.lane.b32.xlu0 %v447, 48
      %v666 = vpop.permute.xlu0 %665
      %667 = vrot.lane.b32.xlu0 %v449, 48
      %v668 = vpop.permute.xlu0 %667
      %669 = vrot.lane.b32.xlu0 %v451, 48
      %v670 = vpop.permute.xlu0 %669
      %679 = vrot.lane.b32.xlu0 %v478, 56
      %v680 = vpop.permute.xlu0 %679
      %681 = vrot.lane.b32.xlu0 %v481, 56
      %v682 = vpop.permute.xlu0 %681
      %683 = vrot.lane.b32.xlu0 %v484, 56
      %v684 = vpop.permute.xlu0 %683
      %685 = vrot.lane.b32.xlu0 %v487, 56
      %v686 = vpop.permute.xlu0 %685
      %687 = vrot.lane.b32.xlu0 %v490, 56
      %v688 = vpop.permute.xlu0 %687
      %689 = vrot.lane.b32.xlu0 %v493, 56
      %v690 = vpop.permute.xlu0 %689
      %691 = vrot.lane.b32.xlu0 %v523, 56
      %v692 = vpop.permute.xlu0 %691
      %693 = vrot.lane.b32.xlu0 %v531, 56
      %v694 = vpop.permute.xlu0 %693
      %703 = vrot.lane.b32.xlu0 %v503, 64
      %v704 = vpop.permute.xlu0 %703
      %705 = vrot.lane.b32.xlu0 %v506, 64
      %v706 = vpop.permute.xlu0 %705
      %707 = vrot.lane.b32.xlu0 %v509, 64
      %v708 = vpop.permute.xlu0 %707
      %709 = vrot.lane.b32.xlu0 %v512, 64
      %v710 = vpop.permute.xlu0 %709
      %711 = vrot.lane.b32.xlu0 %v515, 64
      %v712 = vpop.permute.xlu0 %711
      %713 = vrot.lane.b32.xlu0 %v518, 64
      %v714 = vpop.permute.xlu0 %713
      %715 = vrot.lane.b32.xlu0 %v526, 64
      %v716 = vpop.permute.xlu0 %715
      %717 = vrot.lane.b32.xlu0 %v534, 64
      %v718 = vpop.permute.xlu0 %717
      %vm727 = vcmask 64512
      %v728 = vsel %vm727, %v433, %v536
      %v729 = vsel %vm727, %v435, %v538
      %v730 = vsel %vm727, %v437, %v540
      %v731 = vsel %vm727, %v439, %v542
      %v732 = vsel %vm727, %v441, %v544
      %v733 = vsel %vm727, %v443, %v546
      %v734 = vsel %vm727, %v445, %v548
      %v735 = vsel %vm727, %v447, %v550
      %vm736 = vcmask 130048
      %v737 = vsel %vm736, %v728, %v560
      %v738 = vsel %vm736, %v729, %v562
      %v739 = vsel %vm736, %v730, %v564
      %v740 = vsel %vm736, %v731, %v566
      %v741 = vsel %vm736, %v732, %v568
      %v742 = vsel %vm736, %v733, %v570
      %v743 = vsel %vm736, %v734, %v572
      %v744 = vsel %vm736, %v735, %v574
      %vm745 = vcmask 195584
      %v746 = vsel %vm745, %v737, %v584
      %v747 = vsel %vm745, %v738, %v586
      %v748 = vsel %vm745, %v739, %v588
      %v749 = vsel %vm745, %v740, %v590
      %v750 = vsel %vm745, %v741, %v592
      %v751 = vsel %vm745, %v742, %v594
      %v752 = vsel %vm745, %v743, %v596
      %v753 = vsel %vm745, %v744, %v598
      %vm754 = vcmask 261120
      %v755 = vsel %vm754, %v746, %v608
      %v756 = vsel %vm754, %v747, %v610
      %v757 = vsel %vm754, %v748, %v612
      %v758 = vsel %vm754, %v749, %v614
      %v759 = vsel %vm754, %v750, %v616
      %v760 = vsel %vm754, %v751, %v618
      %v761 = vsel %vm754, %v752, %v620
      %v762 = vsel %vm754, %v753, %v622
      %vm763 = vcmask 326656
      %v764 = vsel %vm763, %v755, %v632
      %v765 = vsel %vm763, %v756, %v634
      %v766 = vsel %vm763, %v757, %v636
      %v767 = vsel %vm763, %v758, %v638
      %v768 = vsel %vm763, %v759, %v640
      %v769 = vsel %vm763, %v760, %v642
      %v770 = vsel %vm763, %v761, %v644
      %v771 = vsel %vm763, %v762, %v646
      %vm772 = vcmask 392192
      %v773 = vsel %vm772, %v764, %v656
      %v774 = vsel %vm772, %v765, %v658
      %v775 = vsel %vm772, %v766, %v660
      %v776 = vsel %vm772, %v767, %v662
      %v777 = vsel %vm772, %v768, %v664
      %v778 = vsel %vm772, %v769, %v666
      %v779 = vsel %vm772, %v770, %v668
      %v780 = vsel %vm772, %v771, %v670
      %vm781 = vcmask 457728
      %v782 = vsel %vm781, %v773, %v680
      %v783 = vsel %vm781, %v774, %v682
      %v784 = vsel %vm781, %v775, %v684
      %v785 = vsel %vm781, %v776, %v686
      %v786 = vsel %vm781, %v777, %v688
      %v787 = vsel %vm781, %v778, %v690
      %v788 = vsel %vm781, %v779, %v692
      %v789 = vsel %vm781, %v780, %v694
      %vm790 = vcmask 523264
      %v791 = vsel %vm790, %v782, %v704
      %v792 = vsel %vm790, %v783, %v706
      %v793 = vsel %vm790, %v784, %v708
      %v794 = vsel %vm790, %v785, %v710
      %v795 = vsel %vm790, %v786, %v712
      %v796 = vsel %vm790, %v787, %v714
      %v797 = vsel %vm790, %v788, %v716
      %v798 = vsel %vm790, %v789, %v718
      %v799 = vld [vmem:[%s3] sm:$0xff]
      %v800 = vld [vmem:[%s3 + $0x8] sm:$0xff]
      %v801 = vld [vmem:[%s3 + $0x10] sm:$0xff]
      %v802 = vld [vmem:[%s3 + $0x18] sm:$0xff]
      %v803 = vld [vmem:[%s3 + $0x20] sm:$0xff]
      %v804 = vld [vmem:[%s3 + $0x28] sm:$0xff]
      %v805 = vld [vmem:[%s3 + $0x30] sm:$0xff]
      %v806 = vld [vmem:[%s3 + $0x38] sm:$0xff]
      %v807 = vld [vmem:[%s3 + $0x40] sm:$0xff]
      %v808 = vld [vmem:[%s4] sm:$0x1]
      %v810 = vperm.slane %v808, 0
      %vm812 = vcmask 588800
      %v814 = vsel %vm812, %v791, 0
      %v817 = vsel %vm812, %v792, 0
      %v820 = vsel %vm812, %v793, 0
      %v823 = vsel %vm812, %v794, 0
      %v826 = vsel %vm812, %v795, 0
      %v829 = vsel %vm812, %v796, 0
      %v832 = vsel %vm812, %v797, 0
      %v835 = vsel %vm812, %v798, 0
      %837 = vmatpush.msra.mxu0 0.0
      %838 = vmatpush.msra.mxu0 0.0
      %839 = vmatpush.msra.mxu0 0.0
      %840 = vmatpush.msra.mxu0 0.0
      %841 = vmatpush.msra.mxu0 0.0
      %842 = vmatpush.msra.mxu0 0.0
      %843 = vmatpush.msra.mxu0 0.0
      %844 = vmatpush.msra.mxu0 %v807
      %845 = vmatpush.msra.mxu0 %v806
      %846 = vmatpush.msra.mxu0 %v805
      %847 = vmatpush.msra.mxu0 %v804
      %848 = vmatpush.msra.mxu0 %v803
      %849 = vmatpush.msra.mxu0 %v802
      %850 = vmatpush.msra.mxu0 %v801
      %851 = vmatpush.msra.mxu0 %v800
      %852 = vmatpush.msra.mxu0 %v799
      %853 = vmatmul.f32.gmra.mxu0 %v814
      %v854 = vpop.f32.mrf.mxu0
      %v855 = vadd.f32 %v810, %v854
      %856 = vmatmul.f32.gmra.mxu0 %v817
      %v857 = vpop.f32.mrf.mxu0
      %v858 = vadd.f32 %v810, %v857
      %859 = vmatmul.f32.gmra.mxu0 %v820
      %v860 = vpop.f32.mrf.mxu0
      %v861 = vadd.f32 %v810, %v860
      %862 = vmatmul.f32.gmra.mxu0 %v823
      %v863 = vpop.f32.mrf.mxu0
      %v864 = vadd.f32 %v810, %v863
      %865 = vmatmul.f32.gmra.mxu0 %v826
      %v866 = vpop.f32.mrf.mxu0
      %v867 = vadd.f32 %v810, %v866
      %868 = vmatmul.f32.gmra.mxu0 %v829
      %v869 = vpop.f32.mrf.mxu0
      %v870 = vadd.f32 %v810, %v869
      %871 = vmatmul.f32.gmra.mxu0 %v832
      %v872 = vpop.f32.mrf.mxu0
      %v873 = vadd.f32 %v810, %v872
      %874 = vmatmul.f32.gmra.mxu0 %v835
      %v875 = vpop.f32.mrf.mxu0
      %v876 = vadd.f32 %v810, %v875
      %877 = vdwg.mxu0
      %878 = vst.msk [vmem:[%s427] sm:$0xff] %vm727, %v855
      %879 = vst.msk [vmem:[%s427 + $0x8] sm:$0xff] %vm727, %v858
      %880 = vst.msk [vmem:[%s427 + $0x10] sm:$0xff] %vm727, %v861
      %881 = vst.msk [vmem:[%s427 + $0x18] sm:$0xff] %vm727, %v864
      %882 = vst.msk [vmem:[%s427 + $0x20] sm:$0xff] %vm727, %v867
      %883 = vst.msk [vmem:[%s427 + $0x28] sm:$0xff] %vm727, %v870
      %884 = vst.msk [vmem:[%s427 + $0x30] sm:$0xff] %vm727, %v873
      %885 = vst.msk [vmem:[%s427 + $0x38] sm:$0xff] %vm727, %v876
      %v886 = vsel %vm727, %v855, 0.0
      %v887 = vsel %vm727, %v858, 0.0
      %v888 = vadd.f32 %v886, %v887
      %v889 = vsel %vm727, %v861, 0.0
      %v890 = vadd.f32 %v888, %v889
      %v891 = vsel %vm727, %v864, 0.0
      %v892 = vadd.f32 %v890, %v891
      %v893 = vsel %vm727, %v867, 0.0
      %v894 = vadd.f32 %v892, %v893
      %v895 = vsel %vm727, %v870, 0.0
      %v896 = vadd.f32 %v894, %v895
      %v897 = vsel %vm727, %v873, 0.0
      %v898 = vadd.f32 %v896, %v897
      %v899 = vsel %vm727, %v876, 0.0
      %v900 = vadd.f32 %v898, %v899
      %v901 = vrot.slane %v900, 4
      %v902 = vadd.f32 %v900, %v901
      %v903 = vrot.slane %v902, 2
      %v904 = vadd.f32 %v902, %v903
      %v905 = vrot.slane %v904, 1
      %v906 = vadd.f32 %v904, %v905
      %v907 = vmul.f32 %v855, %v855
      %v908 = vmul.f32 %v858, %v858
      %v909 = vmul.f32 %v861, %v861
      %v910 = vmul.f32 %v864, %v864
      %v911 = vmul.f32 %v867, %v867
      %v912 = vmul.f32 %v870, %v870
      %v913 = vmul.f32 %v873, %v873
      %v914 = vmul.f32 %v876, %v876
      %v915 = vsel %vm727, %v907, 0.0
      %v916 = vsel %vm727, %v908, 0.0
      %v917 = vadd.f32 %v915, %v916
      %v918 = vsel %vm727, %v909, 0.0
      %v919 = vadd.f32 %v917, %v918
      %v920 = vsel %vm727, %v910, 0.0
      %v921 = vadd.f32 %v919, %v920
      %v922 = vsel %vm727, %v911, 0.0
      %v923 = vadd.f32 %v921, %v922
      %v924 = vsel %vm727, %v912, 0.0
      %v925 = vadd.f32 %v923, %v924
      %v926 = vsel %vm727, %v913, 0.0
      %v927 = vadd.f32 %v925, %v926
      %v928 = vsel %vm727, %v914, 0.0
      %v929 = vadd.f32 %v927, %v928
      %v930 = vrot.slane %v929, 4
      %v931 = vadd.f32 %v929, %v930
      %v932 = vrot.slane %v931, 2
      %v933 = vadd.f32 %v931, %v932
      %v934 = vrot.slane %v933, 1
      %v935 = vadd.f32 %v933, %v934
      %vm936 = vcmask 1040384
      %v937 = vsel %vm936, %v906, %v935
      %p938 = scmp.eq.s32.totalorder %s23, 0
      // Predicated region
      $region41: #{down_lpf_forward.8} parent=39 // pred_check
        %p939 = pneg %p938
      $region42: #{down_lpf_forward.8} parent=39 // pred_check_branch
        %941 = sbr.rel (%p939) target = $region44
      $region43: #{down_lpf_forward.8} parent=39 // pred_region
        %vm942 = vcmask 58368
        %943 = vst.msk [vmem:[%s432] sm:$0x3] %vm942, %v937
      $region44: #{down_lpf_forward.8} parent=39 // pred_fallthru
        _
      %p944 = scmp.ne.s32.totalorder %s23, 0
      // Predicated region
      $region45: #{down_lpf_forward.8} parent=39 // pred_check
        %p945 = pneg %p944
      $region46: #{down_lpf_forward.8} parent=39 // pred_check_branch
        %947 = sbr.rel (%p945) target = $region48
      $region47: #{down_lpf_forward.8} parent=39 // pred_region
        %v948 = vld [vmem:[%s432] sm:$0x3]
        %v949 = vadd.f32 %v948, %v937
        %vm950 = vcmask 58368
        %951 = vst.msk [vmem:[%s432] sm:$0x3] %vm950, %v949
      $region48: #{down_lpf_forward.8} parent=39 // pred_fallthru
        _
      %s952 = smul.u32 8, %s23
      %p953 = scmp.lt.s32.totalorder %s22, 1
      %s954 = scalar_select %p953, %s22, 1
      %p955 = scmp.lt.s32.totalorder %s952, 7
      %s956 = scalar_select %p955, %s952, 7
      %s957 = smul.addr %s954, 8
      %s958 = sadd.s32 %s956, %s957
      %s959 = smul.addr %s958, 8
      %s960 = scalar_lea.vmem %s5, %s959
      %p961 = scmp.lt.s32.totalorder %s22, 1
      %s962 = scalar_select %p961, %s22, 1
      %s963 = smul.addr %s962, 2
      %s964 = scalar_lea.vmem %s6, %s963
      // Predicated region
      $region49: #{down_lpf_forward.8} parent=39 // pred_check
        %p965 = pneg %p186
      $region50: #{down_lpf_forward.8} parent=39 // pred_check_branch
        %967 = sbr.rel (%p965) target = $region52
      $region51: #{down_lpf_forward.8} parent=39 // pred_region
        %s968 = smul.u32 8, %s23
      $region52: #{down_lpf_forward.8} parent=39 // pred_fallthru
        _
      // Predicated region
      $region53: #{down_lpf_forward.8} parent=39 // pred_check
        %p969 = pneg %p212
      $region54: #{down_lpf_forward.8} parent=39 // pred_check_branch
        %971 = sbr.rel (%p969) target = $region56
      $region55: #{down_lpf_forward.8} parent=39 // pred_region
        _
      $region56: #{down_lpf_forward.8} parent=39 // pred_fallthru
        _
    $region40: #{down_lpf_forward.8} parent=5 // pred_fallthru
      _
    %p972 = scmp.le.s32.totalorder 2, %s13
    // Predicated region
    $region57: #{down_lpf_forward.8} parent=5 // pred_check
      %p973 = pneg %p972
    $region58: #{down_lpf_forward.8} parent=5 // pred_check_branch
      %975 = sbr.rel (%p973) target = $region60
    $region59: #{down_lpf_forward.8} parent=5 // pred_region
      %s976 = ssub.s32 %s13, 2
      // Predicated region
      $region61: #{down_lpf_forward.8} parent=59 // pred_check
        %p977 = pneg %p192
      $region62: #{down_lpf_forward.8} parent=59 // pred_check_branch
        %979 = sbr.rel (%p977) target = $region64
      $region63: #{down_lpf_forward.8} parent=59 // pred_region
        %s980 = smul.u32 8, %s25
        %p981 = scmp.lt.s32.totalorder %s24, 1
        %s982 = scalar_select %p981, %s24, 1
        %p983 = scmp.lt.s32.totalorder %s980, 7
        %s984 = scalar_select %p983, %s980, 7
        %s985 = smul.addr %s982, 8
        %s986 = sadd.s32 %s984, %s985
        %s987 = smul.addr %s986, 8
        %s988 = scalar_lea.vmem %s5, %s987
      $region64: #{down_lpf_forward.8} parent=59 // pred_fallthru
        _
      // Predicated region
      $region65: #{down_lpf_forward.8} parent=59 // pred_check
        %p989 = pneg %p218
      $region66: #{down_lpf_forward.8} parent=59 // pred_check_branch
        %991 = sbr.rel (%p989) target = $region68
      $region67: #{down_lpf_forward.8} parent=59 // pred_region
        %p992 = scmp.lt.s32.totalorder %s24, 1
        %s993 = scalar_select %p992, %s24, 1
        %s994 = smul.addr %s993, 2
        %s995 = scalar_lea.vmem %s6, %s994
      $region68: #{down_lpf_forward.8} parent=59 // pred_fallthru
        _
    $region60: #{down_lpf_forward.8} parent=5 // pred_fallthru
      _
  $region6: #{down_lpf_forward.8} parent=0 // loop_footer
    %s17 = sadd.s32 1, %s13
  $region7: #{down_lpf_forward.8} parent=0 // loop_footer_branch
    %12 = sbr.rel target = $region3
  $region8: #{down_lpf_forward.8} parent=0 // loop_exit
    _

</llo_original>
